<compile_context>
chip_gen: v7x
topology: tpu7x:2x2x1
jax: 0.10.0
libtpu: 0.0.40
codegen_flags: <defaults>
</compile_context>

<pallas_src>
import math
import functools

import jax
import jax.numpy as jnp
from jax.experimental import pallas as pl
from jax.experimental.pallas import tpu as pltpu  # noqa: F401  (kept for TPU-specific tweaks)

# ---------------------------------------------------------------------------
# Configuration (small shapes consistent with the module)
# ---------------------------------------------------------------------------
D_MODEL = 32
N_HEADS = 4
D_FF = 64
SEQ = 8
BATCH = 2
LN_EPS = 1e-5


def _ln(x, gamma, beta, eps=LN_EPS):
    mu = jnp.mean(x, axis=-1, keepdims=True)
    var = jnp.mean((x - mu) ** 2, axis=-1, keepdims=True)
    return (x - mu) * jax.lax.rsqrt(var + eps) * gamma + beta


# ---------------------------------------------------------------------------
# Fused TransformerBlock kernel (single invocation, all weights resident)
# ---------------------------------------------------------------------------
def transformer_block_kernel(x_ref, w_ref, vec_ref, o_ref,
                             *, batch, seq, d_model, n_heads, d_ff):
    E = d_model
    dh = E // n_heads

    x = x_ref[...]                                    # (B*T, E)

    # --- packed weight slab (static row/lane slices) ---
    wqkv = w_ref[0:E, :]                              # (E, 3E), Q cols pre-scaled
    wo = w_ref[E:2 * E, :E]                           # (E, E)
    w1 = w_ref[2 * E:3 * E, :d_ff]                    # (E, d_ff)
    w2 = w_ref[3 * E:3 * E + d_ff, :E]                # (d_ff, E)

    # --- packed vector-parameter slab ---
    bqkv = vec_ref[0:1, :]                            # (1, 3E), Q part pre-scaled
    bo = vec_ref[1:2, :E]
    g1 = vec_ref[2:3, :E]
    be1 = vec_ref[3:4, :E]
    bf1 = vec_ref[4:5, :d_ff]
    bf2 = vec_ref[5:6, :E]
    g2 = vec_ref[6:7, :E]
    be2 = vec_ref[7:8, :E]

    # --- fused QKV projection on all B*T rows at once ---
    qkv = jnp.dot(x, wqkv, preferred_element_type=jnp.float32) + bqkv   # (B*T, 3E)
    qkv3 = qkv.reshape(batch, seq, 3 * E)             # leading-dim split (free)

    # --- batched-head attention: stack heads along the leading batch axis ---
    q_heads = [qkv3[:, :, h * dh:(h + 1) * dh] for h in range(n_heads)]
    k_heads = [qkv3[:, :, E + h * dh:E + (h + 1) * dh] for h in range(n_heads)]
    v_heads = [qkv3[:, :, 2 * E + h * dh:2 * E + (h + 1) * dh] for h in range(n_heads)]
    q = jnp.concatenate(q_heads, axis=0)              # (H*B, T, dh)
    k = jnp.concatenate(k_heads, axis=0)
    v = jnp.concatenate(v_heads, axis=0)

    # scores: one batched einsum; softmax scale already folded into Wq/bq
    s = jnp.einsum('bqd,bkd->bqk', q, k,
                   preferred_element_type=jnp.float32)                  # (H*B, T, T)
    m = jnp.max(s, axis=-1, keepdims=True)
    p = jnp.exp(s - m)
    p = p / jnp.sum(p, axis=-1, keepdims=True)        # exact softmax (one set of ops)
    # TODO(synk): train-mode attention/residual Dropout not modeled (eval -> identity).

    ctx_s = jnp.einsum('bqk,bkd->bqd', p, v,
                       preferred_element_type=jnp.float32)              # (H*B, T, dh)
    ctx = jnp.concatenate(
        [ctx_s[h * batch:(h + 1) * batch] for h in range(n_heads)],
        axis=-1)                                      # (B, T, E)
    ctx = ctx.reshape(batch * seq, E)                 # leading-dim merge (free)

    # --- output projection + residual + LayerNorm1 ---
    attn = jnp.dot(ctx, wo, preferred_element_type=jnp.float32) + bo
    x1 = _ln(x + attn, g1, be1)

    # --- feed-forward + residual + LayerNorm2 ---
    hff = jnp.maximum(jnp.dot(x1, w1, preferred_element_type=jnp.float32) + bf1, 0.0)
    ff = jnp.dot(hff, w2, preferred_element_type=jnp.float32) + bf2
    o_ref[...] = _ln(x1 + ff, g2, be2).astype(o_ref.dtype)


def transformer_block(x, kp):
    """x: (B, T, E) float32; kp: dict with packed 'w_slab' / 'vec_slab'."""
    B, T, E = x.shape
    BT = B * T
    dh = E // N_HEADS

    kernel = functools.partial(transformer_block_kernel,
                               batch=B, seq=T, d_model=E,
                               n_heads=N_HEADS, d_ff=D_FF)

    flops = (2 * BT * E * (3 * E)                 # QKV proj
             + 2 * (B * N_HEADS) * T * T * dh * 2  # scores + PV
             + 2 * BT * E * E                      # out proj
             + 2 * BT * E * D_FF * 2)              # FF1 + FF2
    transcendentals = B * N_HEADS * T * T + 2 * BT
    bytes_accessed = 4 * (2 * BT * E + kp["w_slab"].size + kp["vec_slab"].size)

    out2d = pl.pallas_call(
        kernel,
        out_shape=jax.ShapeDtypeStruct((BT, E), jnp.float32),
        cost_estimate=pl.CostEstimate(flops=flops,
                                      transcendentals=transcendentals,
                                      bytes_accessed=bytes_accessed),
    )(x.reshape(BT, E).astype(jnp.float32), kp["w_slab"], kp["vec_slab"])
    return out2d.reshape(B, T, E)


# ---------------------------------------------------------------------------
# Parameters (PyTorch conventions) + packed kernel parameters
# ---------------------------------------------------------------------------
def init_params():
    key = jax.random.PRNGKey(0)
    ks = jax.random.split(key, 12)
    nrm = lambda k, s, sc=0.1: sc * jax.random.normal(k, s, jnp.float32)
    return dict(
        in_w=nrm(ks[0], (3 * D_MODEL, D_MODEL)),   # packed q,k,v (PyTorch order)
        in_b=nrm(ks[1], (3 * D_MODEL,)),
        out_w=nrm(ks[2], (D_MODEL, D_MODEL)),
        out_b=nrm(ks[3], (D_MODEL,)),
        ln1_g=1.0 + nrm(ks[4], (D_MODEL,)),
        ln1_b=nrm(ks[5], (D_MODEL,)),
        ff1_w=nrm(ks[6], (D_FF, D_MODEL)),
        ff1_b=nrm(ks[7], (D_FF,)),
        ff2_w=nrm(ks[8], (D_MODEL, D_FF)),
        ff2_b=nrm(ks[9], (D_MODEL,)),
        ln2_g=1.0 + nrm(ks[10], (D_MODEL,)),
        ln2_b=nrm(ks[11], (D_MODEL,)),
    )


def make_kernel_params(p):
    """Pre-transpose weights, fold the softmax scale, and pack into 2 slabs."""
    E, H, DFF = D_MODEL, N_HEADS, D_FF
    dh = E // H
    scale = 1.0 / math.sqrt(dh)
    width = 3 * E                                     # slab lane width (96)

    wqkv = jnp.asarray(p["in_w"].T)                   # (E, 3E)
    bqkv = jnp.asarray(p["in_b"])                     # (3E,)
    # fold 1/sqrt(d_head) into the Q columns / Q bias
    wqkv = wqkv.at[:, :E].multiply(scale)
    bqkv = bqkv.at[:E].multiply(scale)

    wo = jnp.asarray(p["out_w"].T)                    # (E, E)
    w1 = jnp.asarray(p["ff1_w"].T)                    # (E, DFF)
    w2 = jnp.asarray(p["ff2_w"].T)                    # (DFF, E)

    def pad_cols(mat):
        return jnp.pad(mat, ((0, 0), (0, width - mat.shape[1])))

    w_slab = jnp.concatenate(
        [pad_cols(wqkv), pad_cols(wo), pad_cols(w1), pad_cols(w2)], axis=0)  # (160, 96)

    def row(vec):
        v = jnp.asarray(vec).reshape(1, -1)
        return jnp.pad(v, ((0, 0), (0, width - v.shape[1])))

    vec_slab = jnp.concatenate(
        [row(bqkv), row(p["out_b"]), row(p["ln1_g"]), row(p["ln1_b"]),
         row(p["ff1_b"]), row(p["ff2_b"]), row(p["ln2_g"]), row(p["ln2_b"])],
        axis=0)                                       # (8, 96)

    return dict(w_slab=w_slab, vec_slab=vec_slab)


# ---------------------------------------------------------------------------
# Pure-JAX reference (exact PyTorch eval semantics) for a correctness check
# ---------------------------------------------------------------------------
def transformer_block_ref(x, p):
    B, T, E = x.shape
    dh = E // N_HEADS
    qkv = jnp.einsum('bte,fe->btf', x, p["in_w"]) + p["in_b"]
    q, k, v = qkv[..., :E], qkv[..., E:2 * E], qkv[..., 2 * E:]
    split = lambda t: t.reshape(B, T, N_HEADS, dh).transpose(0, 2, 1, 3)
    qh, kh, vh = split(q), split(k), split(v)
    s = jnp.einsum('bhqd,bhkd->bhqk', qh, kh) / math.sqrt(dh)
    a = jax.nn.softmax(s, axis=-1)
    ctx = jnp.einsum('bhqk,bhkd->bhqd', a, vh).transpose(0, 2, 1, 3).reshape(B, T, E)
    attn = jnp.einsum('bte,fe->btf', ctx, p["out_w"]) + p["out_b"]
    x1 = _ln(x + attn, p["ln1_g"], p["ln1_b"])
    hff = jax.nn.relu(jnp.einsum('bte,fe->btf', x1, p["ff1_w"]) + p["ff1_b"])
    ff = jnp.einsum('btf,ef->bte', hff, p["ff2_w"]) + p["ff2_b"]
    return _ln(x1 + ff, p["ln2_g"], p["ln2_b"])


# ---------------------------------------------------------------------------
if __name__ == "__main__":
    params = init_params()
    kparams = make_kernel_params(params)

    x = jax.random.normal(jax.random.fold_in(jax.random.PRNGKey(0), 123),
                          (BATCH, SEQ, D_MODEL), dtype=jnp.float32)

    fwd = jax.jit(transformer_block)
    out = fwd(x, kparams)
    out = jax.block_until_ready(out)

    assert out.shape == (BATCH, SEQ, D_MODEL)
    assert bool(jnp.all(jnp.isfinite(out)))

    ref = transformer_block_ref(x, params)
    max_err = float(jnp.max(jnp.abs(out - ref)))
    assert max_err < 1e-3, f"mismatch vs reference: {max_err}"

    print("KERNEL_OK")
</pallas_src>

<mosaic_0001>
module attributes {stable_mosaic.version = 11 : i64} {
  func.func @transformer_block_kernel(%arg0: memref<16x32xf32, #tpu.memory_space<vmem>>, %arg1: memref<160x96xf32, #tpu.memory_space<vmem>>, %arg2: memref<8x96xf32, #tpu.memory_space<vmem>>, %arg3: memref<16x32xf32, #tpu.memory_space<vmem>>) attributes {dimension_semantics = [], scalar_prefetch = 0 : i64, scratch_operands = 0 : i64, tpu.core_type = #tpu.core_type<tc>} {
    %c0 = arith.constant 0 : index
    %c0_0 = arith.constant 0 : index
    %0 = vector.load %arg0[%c0, %c0_0] : memref<16x32xf32, #tpu.memory_space<vmem>>, vector<16x32xf32>
    %c0_1 = arith.constant 0 : index
    %c0_2 = arith.constant 0 : index
    %1 = vector.load %arg1[%c0_1, %c0_2] : memref<160x96xf32, #tpu.memory_space<vmem>>, vector<32x96xf32>
    %c32 = arith.constant 32 : index
    %c0_3 = arith.constant 0 : index
    %2 = vector.load %arg1[%c32, %c0_3] : memref<160x96xf32, #tpu.memory_space<vmem>>, vector<32x32xf32>
    %c64 = arith.constant 64 : index
    %c0_4 = arith.constant 0 : index
    %3 = vector.load %arg1[%c64, %c0_4] : memref<160x96xf32, #tpu.memory_space<vmem>>, vector<32x64xf32>
    %c96 = arith.constant 96 : index
    %c0_5 = arith.constant 0 : index
    %4 = vector.load %arg1[%c96, %c0_5] : memref<160x96xf32, #tpu.memory_space<vmem>>, vector<64x32xf32>
    %c0_6 = arith.constant 0 : index
    %c0_7 = arith.constant 0 : index
    %5 = vector.load %arg2[%c0_6, %c0_7] : memref<8x96xf32, #tpu.memory_space<vmem>>, vector<1x96xf32>
    %c1 = arith.constant 1 : index
    %c0_8 = arith.constant 0 : index
    %6 = vector.load %arg2[%c1, %c0_8] : memref<8x96xf32, #tpu.memory_space<vmem>>, vector<1x32xf32>
    %c2 = arith.constant 2 : index
    %c0_9 = arith.constant 0 : index
    %7 = vector.load %arg2[%c2, %c0_9] : memref<8x96xf32, #tpu.memory_space<vmem>>, vector<1x32xf32>
    %c3 = arith.constant 3 : index
    %c0_10 = arith.constant 0 : index
    %8 = vector.load %arg2[%c3, %c0_10] : memref<8x96xf32, #tpu.memory_space<vmem>>, vector<1x32xf32>
    %c4 = arith.constant 4 : index
    %c0_11 = arith.constant 0 : index
    %9 = vector.load %arg2[%c4, %c0_11] : memref<8x96xf32, #tpu.memory_space<vmem>>, vector<1x64xf32>
    %c5 = arith.constant 5 : index
    %c0_12 = arith.constant 0 : index
    %10 = vector.load %arg2[%c5, %c0_12] : memref<8x96xf32, #tpu.memory_space<vmem>>, vector<1x32xf32>
    %c6 = arith.constant 6 : index
    %c0_13 = arith.constant 0 : index
    %11 = vector.load %arg2[%c6, %c0_13] : memref<8x96xf32, #tpu.memory_space<vmem>>, vector<1x32xf32>
    %c7 = arith.constant 7 : index
    %c0_14 = arith.constant 0 : index
    %12 = vector.load %arg2[%c7, %c0_14] : memref<8x96xf32, #tpu.memory_space<vmem>>, vector<1x32xf32>
    %cst = arith.constant dense<0.000000e+00> : vector<16x96xf32>
    %13 = tpu.matmul %0, %1, %cst {dimension_numbers = #tpu.dot_dimension_numbers<[1], [0], [0], [1], [0, 0, 1, 1], [], []>} : vector<16x32xf32>, vector<32x96xf32>, vector<16x96xf32> -> vector<16x96xf32>
    %14 = vector.broadcast %5 : vector<1x96xf32> to vector<16x96xf32>
    %15 = arith.addf %13, %14 : vector<16x96xf32>
    %16 = vector.shape_cast %15 : vector<16x96xf32> to vector<2x8x96xf32>
    %17 = vector.extract_strided_slice %16 {offsets = [0, 0, 0], sizes = [2, 8, 8], strides = [1, 1, 1]} : vector<2x8x96xf32> to vector<2x8x8xf32>
    %18 = vector.extract_strided_slice %16 {offsets = [0, 0, 8], sizes = [2, 8, 8], strides = [1, 1, 1]} : vector<2x8x96xf32> to vector<2x8x8xf32>
    %19 = vector.extract_strided_slice %16 {offsets = [0, 0, 16], sizes = [2, 8, 8], strides = [1, 1, 1]} : vector<2x8x96xf32> to vector<2x8x8xf32>
    %20 = vector.extract_strided_slice %16 {offsets = [0, 0, 24], sizes = [2, 8, 8], strides = [1, 1, 1]} : vector<2x8x96xf32> to vector<2x8x8xf32>
    %21 = vector.extract_strided_slice %16 {offsets = [0, 0, 32], sizes = [2, 8, 8], strides = [1, 1, 1]} : vector<2x8x96xf32> to vector<2x8x8xf32>
    %22 = vector.extract_strided_slice %16 {offsets = [0, 0, 40], sizes = [2, 8, 8], strides = [1, 1, 1]} : vector<2x8x96xf32> to vector<2x8x8xf32>
    %23 = vector.extract_strided_slice %16 {offsets = [0, 0, 48], sizes = [2, 8, 8], strides = [1, 1, 1]} : vector<2x8x96xf32> to vector<2x8x8xf32>
    %24 = vector.extract_strided_slice %16 {offsets = [0, 0, 56], sizes = [2, 8, 8], strides = [1, 1, 1]} : vector<2x8x96xf32> to vector<2x8x8xf32>
    %25 = vector.extract_strided_slice %16 {offsets = [0, 0, 64], sizes = [2, 8, 8], strides = [1, 1, 1]} : vector<2x8x96xf32> to vector<2x8x8xf32>
    %26 = vector.extract_strided_slice %16 {offsets = [0, 0, 72], sizes = [2, 8, 8], strides = [1, 1, 1]} : vector<2x8x96xf32> to vector<2x8x8xf32>
    %27 = vector.extract_strided_slice %16 {offsets = [0, 0, 80], sizes = [2, 8, 8], strides = [1, 1, 1]} : vector<2x8x96xf32> to vector<2x8x8xf32>
    %28 = vector.extract_strided_slice %16 {offsets = [0, 0, 88], sizes = [2, 8, 8], strides = [1, 1, 1]} : vector<2x8x96xf32> to vector<2x8x8xf32>
    %29 = tpu.concatenate %17, %18, %19, %20 in 0 : vector<2x8x8xf32>, vector<2x8x8xf32>, vector<2x8x8xf32>, vector<2x8x8xf32> -> vector<8x8x8xf32>
    %30 = tpu.concatenate %21, %22, %23, %24 in 0 : vector<2x8x8xf32>, vector<2x8x8xf32>, vector<2x8x8xf32>, vector<2x8x8xf32> -> vector<8x8x8xf32>
    %31 = tpu.concatenate %25, %26, %27, %28 in 0 : vector<2x8x8xf32>, vector<2x8x8xf32>, vector<2x8x8xf32>, vector<2x8x8xf32> -> vector<8x8x8xf32>
    "tpu.trace_start"() <{level = 10 : i32, message = "bqd,bkd->bqk"}> : () -> ()
    %cst_15 = arith.constant dense<0.000000e+00> : vector<8x8x8xf32>
    %32 = tpu.matmul %29, %30, %cst_15 {dimension_numbers = #tpu.dot_dimension_numbers<[2], [2], [1], [1], [0, 0, 0, 1, 1, 1], [0], [0]>} : vector<8x8x8xf32>, vector<8x8x8xf32>, vector<8x8x8xf32> -> vector<8x8x8xf32>
    "tpu.trace_stop"() : () -> ()
    %cst_16 = arith.constant dense<0xFF800000> : vector<8x8xf32>
    %33 = vector.multi_reduction <maximumf>, %32, %cst_16 [2] : vector<8x8x8xf32> to vector<8x8xf32>
    %34 = vector.shape_cast %33 : vector<8x8xf32> to vector<8x8x1xf32>
    %35 = vector.broadcast %34 : vector<8x8x1xf32> to vector<8x8x8xf32>
    %36 = arith.subf %32, %35 : vector<8x8x8xf32>
    %37 = math.exp %36 : vector<8x8x8xf32>
    %cst_17 = arith.constant dense<0.000000e+00> : vector<8x8xf32>
    %38 = vector.multi_reduction <add>, %37, %cst_17 [2] : vector<8x8x8xf32> to vector<8x8xf32>
    %39 = vector.shape_cast %38 : vector<8x8xf32> to vector<8x8x1xf32>
    %40 = vector.broadcast %39 : vector<8x8x1xf32> to vector<8x8x8xf32>
    %41 = arith.divf %37, %40 : vector<8x8x8xf32>
    "tpu.trace_start"() <{level = 10 : i32, message = "bqk,bkd->bqd"}> : () -> ()
    %cst_18 = arith.constant dense<0.000000e+00> : vector<8x8x8xf32>
    %42 = tpu.matmul %41, %31, %cst_18 {dimension_numbers = #tpu.dot_dimension_numbers<[2], [1], [1], [2], [0, 0, 0, 1, 1, 2], [0], [0]>} : vector<8x8x8xf32>, vector<8x8x8xf32>, vector<8x8x8xf32> -> vector<8x8x8xf32>
    "tpu.trace_stop"() : () -> ()
    %43 = vector.extract_strided_slice %42 {offsets = [0, 0, 0], sizes = [2, 8, 8], strides = [1, 1, 1]} : vector<8x8x8xf32> to vector<2x8x8xf32>
    %44 = vector.extract_strided_slice %42 {offsets = [2, 0, 0], sizes = [2, 8, 8], strides = [1, 1, 1]} : vector<8x8x8xf32> to vector<2x8x8xf32>
    %45 = vector.extract_strided_slice %42 {offsets = [4, 0, 0], sizes = [2, 8, 8], strides = [1, 1, 1]} : vector<8x8x8xf32> to vector<2x8x8xf32>
    %46 = vector.extract_strided_slice %42 {offsets = [6, 0, 0], sizes = [2, 8, 8], strides = [1, 1, 1]} : vector<8x8x8xf32> to vector<2x8x8xf32>
    %47 = tpu.concatenate %43, %44, %45, %46 in 2 : vector<2x8x8xf32>, vector<2x8x8xf32>, vector<2x8x8xf32>, vector<2x8x8xf32> -> vector<2x8x32xf32>
    %48 = vector.shape_cast %47 : vector<2x8x32xf32> to vector<16x32xf32>
    %cst_19 = arith.constant dense<0.000000e+00> : vector<16x32xf32>
    %49 = tpu.matmul %48, %2, %cst_19 {dimension_numbers = #tpu.dot_dimension_numbers<[1], [0], [0], [1], [0, 0, 1, 1], [], []>} : vector<16x32xf32>, vector<32x32xf32>, vector<16x32xf32> -> vector<16x32xf32>
    %50 = vector.broadcast %6 : vector<1x32xf32> to vector<16x32xf32>
    %51 = arith.addf %49, %50 : vector<16x32xf32>
    %52 = arith.addf %0, %51 : vector<16x32xf32>
    %cst_20 = arith.constant dense<0.000000e+00> : vector<16xf32>
    %53 = vector.multi_reduction <add>, %52, %cst_20 [1] : vector<16x32xf32> to vector<16xf32>
    %54 = vector.shape_cast %53 : vector<16xf32> to vector<16x1xf32>
    %cst_21 = arith.constant 3.200000e+01 : f32
    %55 = vector.broadcast %cst_21 : f32 to vector<16x1xf32>
    %56 = arith.divf %54, %55 : vector<16x1xf32>
    %57 = vector.broadcast %56 : vector<16x1xf32> to vector<16x32xf32>
    %58 = arith.subf %52, %57 : vector<16x32xf32>
    %59 = arith.mulf %58, %58 : vector<16x32xf32>
    %cst_22 = arith.constant dense<0.000000e+00> : vector<16xf32>
    %60 = vector.multi_reduction <add>, %59, %cst_22 [1] : vector<16x32xf32> to vector<16xf32>
    %61 = vector.shape_cast %60 : vector<16xf32> to vector<16x1xf32>
    %cst_23 = arith.constant 3.200000e+01 : f32
    %62 = vector.broadcast %cst_23 : f32 to vector<16x1xf32>
    %63 = arith.divf %61, %62 : vector<16x1xf32>
    %64 = vector.broadcast %56 : vector<16x1xf32> to vector<16x32xf32>
    %65 = arith.subf %52, %64 : vector<16x32xf32>
    %cst_24 = arith.constant 9.99999974E-6 : f32
    %66 = vector.broadcast %cst_24 : f32 to vector<16x1xf32>
    %67 = arith.addf %63, %66 : vector<16x1xf32>
    %68 = math.rsqrt %67 : vector<16x1xf32>
    %69 = vector.broadcast %68 : vector<16x1xf32> to vector<16x32xf32>
    %70 = arith.mulf %65, %69 : vector<16x32xf32>
    %71 = vector.broadcast %7 : vector<1x32xf32> to vector<16x32xf32>
    %72 = arith.mulf %70, %71 : vector<16x32xf32>
    %73 = vector.broadcast %8 : vector<1x32xf32> to vector<16x32xf32>
    %74 = arith.addf %72, %73 : vector<16x32xf32>
    %cst_25 = arith.constant dense<0.000000e+00> : vector<16x64xf32>
    %75 = tpu.matmul %74, %3, %cst_25 {dimension_numbers = #tpu.dot_dimension_numbers<[1], [0], [0], [1], [0, 0, 1, 1], [], []>} : vector<16x32xf32>, vector<32x64xf32>, vector<16x64xf32> -> vector<16x64xf32>
    %76 = vector.broadcast %9 : vector<1x64xf32> to vector<16x64xf32>
    %77 = arith.addf %75, %76 : vector<16x64xf32>
    %cst_26 = arith.constant 0.000000e+00 : f32
    %78 = vector.broadcast %cst_26 : f32 to vector<16x64xf32>
    %79 = arith.maximumf %77, %78 : vector<16x64xf32>
    %cst_27 = arith.constant dense<0.000000e+00> : vector<16x32xf32>
    %80 = tpu.matmul %79, %4, %cst_27 {dimension_numbers = #tpu.dot_dimension_numbers<[1], [0], [0], [1], [0, 0, 1, 1], [], []>} : vector<16x64xf32>, vector<64x32xf32>, vector<16x32xf32> -> vector<16x32xf32>
    %81 = vector.broadcast %10 : vector<1x32xf32> to vector<16x32xf32>
    %82 = arith.addf %80, %81 : vector<16x32xf32>
    %83 = arith.addf %74, %82 : vector<16x32xf32>
    %cst_28 = arith.constant dense<0.000000e+00> : vector<16xf32>
    %84 = vector.multi_reduction <add>, %83, %cst_28 [1] : vector<16x32xf32> to vector<16xf32>
    %85 = vector.shape_cast %84 : vector<16xf32> to vector<16x1xf32>
    %cst_29 = arith.constant 3.200000e+01 : f32
    %86 = vector.broadcast %cst_29 : f32 to vector<16x1xf32>
    %87 = arith.divf %85, %86 : vector<16x1xf32>
    %88 = vector.broadcast %87 : vector<16x1xf32> to vector<16x32xf32>
    %89 = arith.subf %83, %88 : vector<16x32xf32>
    %90 = arith.mulf %89, %89 : vector<16x32xf32>
    %cst_30 = arith.constant dense<0.000000e+00> : vector<16xf32>
    %91 = vector.multi_reduction <add>, %90, %cst_30 [1] : vector<16x32xf32> to vector<16xf32>
    %92 = vector.shape_cast %91 : vector<16xf32> to vector<16x1xf32>
    %cst_31 = arith.constant 3.200000e+01 : f32
    %93 = vector.broadcast %cst_31 : f32 to vector<16x1xf32>
    %94 = arith.divf %92, %93 : vector<16x1xf32>
    %95 = vector.broadcast %87 : vector<16x1xf32> to vector<16x32xf32>
    %96 = arith.subf %83, %95 : vector<16x32xf32>
    %cst_32 = arith.constant 9.99999974E-6 : f32
    %97 = vector.broadcast %cst_32 : f32 to vector<16x1xf32>
    %98 = arith.addf %94, %97 : vector<16x1xf32>
    %99 = math.rsqrt %98 : vector<16x1xf32>
    %100 = vector.broadcast %99 : vector<16x1xf32> to vector<16x32xf32>
    %101 = arith.mulf %96, %100 : vector<16x32xf32>
    %102 = vector.broadcast %11 : vector<1x32xf32> to vector<16x32xf32>
    %103 = arith.mulf %101, %102 : vector<16x32xf32>
    %104 = vector.broadcast %12 : vector<1x32xf32> to vector<16x32xf32>
    %105 = arith.addf %103, %104 : vector<16x32xf32>
    %c0_33 = arith.constant 0 : index
    %c0_34 = arith.constant 0 : index
    %106 = vector.load %arg3[%c0_33, %c0_34] : memref<16x32xf32, #tpu.memory_space<vmem>>, vector<16x32xf32>
    tpu.vector_store %arg3[%c0_33, %c0_34], %105 {strides = array<i32>} : memref<16x32xf32, #tpu.memory_space<vmem>>, vector<16x32xf32>,
    return
  }
}

</mosaic_0001>

<llo_original>
// kernel: transformer_block.1
$region0: #{transformer_block.1}
  #allocation0 [shape = 'u32[]', space=smem, size = 0x4, offset = 0x4, fixed_abs, tag = 'smem constant byte address 0x4 - core index']
  #allocation1 [shape = 'u32[144,128]{1,0:T(1,128)}', space=vmem, size = 0x12000, scoped, tag = 'internal scratch']
  %s0 = inlined_call_operand.hbm [shape: f32[16,32], index: 0, kind: input, shape index: {}]
  %s1 = inlined_call_operand.hbm [shape: f32[160,96], index: 1, kind: input, shape index: {}]
  %s2 = inlined_call_operand.hbm [shape: f32[8,96], index: 2, kind: input, shape index: {}]
  %s3 = inlined_call_operand.hbm [shape: f32[16,32], index: 3, kind: output, shape index: {}]
  %s4 = sld [smem:[#allocation0]]
  $region34: #{transformer_block.1} parent=0
    _
  %s6 = ssub.s32 1, %s4
  %s7 = scalar_select 0, %s6, %s4
  $region1: #{transformer_block.1} parent=0
    #allocation2 [shape = 'u8[8192]{0}', space=vmem, size = 0x2000, scoped, tag = 'input window, operand 0, single buffered']
    #allocation3 [shape = 's32[1]{0}', space=sflag, size = 0x4, scoped, tag = 'scoped memory for transformer_block.1']
    #allocation4 [shape = 's32[1]{0}', space=sflag, size = 0x4, scoped, tag = 'scoped memory for transformer_block.1']
    #allocation5 [shape = 'u8[81920]{0}', space=vmem, size = 0x14000, scoped, tag = 'input window, operand 1, single buffered']
    #allocation6 [shape = 's32[1]{0}', space=sflag, size = 0x4, scoped, tag = 'scoped memory for transformer_block.1']
    #allocation7 [shape = 'u8[4096]{0}', space=vmem, size = 0x1000, scoped, tag = 'input window, operand 2, single buffered']
    #allocation8 [shape = 'u8[8192]{0}', space=vmem, size = 0x2000, scoped, tag = 'output window, operand 0, single buffered']
    %8 = vsyncpa [#allocation3], 0
    %9 = vsyncpa [#allocation6], 0
    %10 = vsyncpa [#allocation4], 0
    // Predicated region
    $region2: #{transformer_block.1} parent=1 // pred_check
      _
    $region3: #{transformer_block.1} parent=1 // pred_check_branch
      %12 = sbr.rel (0) target = $region5
    $region4: #{transformer_block.1} parent=1 // pred_region
      %s14 = ssub.s32 256, 256
      %15 = vsyncadd [#allocation3], %s14
      %s16 = sshll.u32 [#allocation2], 4
      %s17 = int_to_ptr.vmem [resolvable:$true] %s16
      %22 = dma.hbm_to_vmem [thread:$0]  %s0, 256, %s17, [#allocation3], 128, 128, 8
    $region5: #{transformer_block.1} parent=1 // pred_fallthru
      _
    // Predicated region
    $region6: #{transformer_block.1} parent=1 // pred_check
      _
    $region7: #{transformer_block.1} parent=1 // pred_check_branch
      %24 = sbr.rel (0) target = $region9
    $region8: #{transformer_block.1} parent=1 // pred_region
      %s26 = ssub.s32 2560, 2560
      %27 = vsyncadd [#allocation6], %s26
      %s28 = sshll.u32 [#allocation5], 4
      %s29 = int_to_ptr.vmem [resolvable:$true] %s28
      %34 = dma.hbm_to_vmem [thread:$0]  %s1, 2560, %s29, [#allocation6], 128, 128, 8
    $region9: #{transformer_block.1} parent=1 // pred_fallthru
      _
    // Predicated region
    $region10: #{transformer_block.1} parent=1 // pred_check
      _
    $region11: #{transformer_block.1} parent=1 // pred_check_branch
      %36 = sbr.rel (0) target = $region13
    $region12: #{transformer_block.1} parent=1 // pred_region
      %s38 = ssub.s32 128, 128
      %39 = vsyncadd [#allocation6], %s38
      %s41 = sshll.u32 [#allocation7], 4
      %s42 = int_to_ptr.vmem [resolvable:$true] %s41
      %44 = dma.hbm_to_vmem [thread:$0]  %s2, 128, %s42, [#allocation6]
    $region13: #{transformer_block.1} parent=1 // pred_fallthru
      _
    // Predicated region
    $region14: #{transformer_block.1} parent=1 // pred_check
      _
    $region15: #{transformer_block.1} parent=1 // pred_check_branch
      %46 = sbr.rel (0) target = $region17
    $region16: #{transformer_block.1} parent=1 // pred_region
      %47 = dma.done [#allocation3], 256
    $region17: #{transformer_block.1} parent=1 // pred_fallthru
      _
    // Predicated region
    $region18: #{transformer_block.1} parent=1 // pred_check
      _
    $region19: #{transformer_block.1} parent=1 // pred_check_branch
      %49 = sbr.rel (0) target = $region21
    $region20: #{transformer_block.1} parent=1 // pred_region
      %50 = dma.done [#allocation6], 2560
    $region21: #{transformer_block.1} parent=1 // pred_fallthru
      _
    // Predicated region
    $region22: #{transformer_block.1} parent=1 // pred_check
      _
    $region23: #{transformer_block.1} parent=1 // pred_check_branch
      %52 = sbr.rel (0) target = $region25
    $region24: #{transformer_block.1} parent=1 // pred_region
      %53 = dma.done [#allocation6], 128
    $region25: #{transformer_block.1} parent=1 // pred_fallthru
      _
    %v54 = vld [vmem:[#allocation2] sm:$0xff]
    %v55 = vld [vmem:[#allocation2 + $0x8] sm:$0xff]
    %v56 = vld [vmem:[#allocation5] sm:$0xff]
    %v57 = vld [vmem:[#allocation5 + $0x8] sm:$0xff]
    %v58 = vld [vmem:[#allocation5 + $0x10] sm:$0xff]
    %v59 = vld [vmem:[#allocation5 + $0x18] sm:$0xff]
    %v60 = vld [vmem:[#allocation5 + $0x20] sm:$0xff]
    %v61 = vld [vmem:[#allocation5 + $0x28] sm:$0xff]
    %v62 = vld [vmem:[#allocation5 + $0x30] sm:$0xff]
    %v63 = vld [vmem:[#allocation5 + $0x38] sm:$0xff]
    %v64 = vld [vmem:[#allocation5 + $0x40] sm:$0xff]
    %v65 = vld [vmem:[#allocation5 + $0x48] sm:$0xff]
    %v66 = vld [vmem:[#allocation5 + $0x50] sm:$0xff]
    %v67 = vld [vmem:[#allocation5 + $0x58] sm:$0xff]
    %v68 = vld [vmem:[#allocation5 + $0x60] sm:$0xff]
    %v69 = vld [vmem:[#allocation5 + $0x68] sm:$0xff]
    %v70 = vld [vmem:[#allocation5 + $0x70] sm:$0xff]
    %v71 = vld [vmem:[#allocation5 + $0x78] sm:$0xff]
    %v72 = vld [vmem:[#allocation5 + $0x80] sm:$0xff]
    %v73 = vld [vmem:[#allocation5 + $0x88] sm:$0xff]
    %v74 = vld [vmem:[#allocation5 + $0x90] sm:$0xff]
    %v75 = vld [vmem:[#allocation5 + $0x98] sm:$0xff]
    %v76 = vld [vmem:[#allocation7] sm:$0x1]
    %v77 = vld [vmem:[#allocation7 + $0x1] sm:$0x1]
    %v78 = vld [vmem:[#allocation7 + $0x2] sm:$0x1]
    %v79 = vld [vmem:[#allocation7 + $0x3] sm:$0x1]
    %v80 = vld [vmem:[#allocation7 + $0x4] sm:$0x1]
    %v81 = vld [vmem:[#allocation7 + $0x5] sm:$0x1]
    %v82 = vld [vmem:[#allocation7 + $0x6] sm:$0x1]
    %v83 = vld [vmem:[#allocation7 + $0x7] sm:$0x1]
    %v84 = vlaneseq
    %v85 = vshrl.u32 %v84, 7
    %v86 = vsub.s32 0, %v85
    %v87 = vrot.slane %v76, %v86
    %vm88 = vcmask 261120
    %v90 = vsel %vm88, %v54, 0
    %v93 = vsel %vm88, %v55, 0
    %95 = vmatprep.subr.mxu0 0.0
    %96 = vmatpush1.msra.mxu0 %v56
    %97 = vmatprep.subr.mxu0 0.0
    %98 = vmatpush1.msra.mxu0 %v57
    %99 = vmatprep.subr.mxu0 0.0
    %100 = vmatpush1.msra.mxu0 %v58
    %101 = vmatprep.subr.mxu0 0.0
    %102 = vmatpush1.msra.mxu0 %v59
    %103 = vmatprep.subr.mxu0 0.0
    %104 = vmatpush1.msra.mxu0 0.0
    %105 = vmatprep.subr.mxu0 0.0
    %106 = vmatpush1.msra.mxu0 0.0
    %107 = vmatprep.subr.mxu0 0.0
    %108 = vmatpush1.msra.mxu0 0.0
    %109 = vmatprep.subr.mxu0 0.0
    %110 = vmatpush1.msra.mxu0 0.0
    %111 = vmatprep.subr.mxu0 0.0
    %112 = vmatpush1.msra.mxu0 0.0
    %113 = vmatprep.subr.mxu0 0.0
    %114 = vmatpush1.msra.mxu0 0.0
    %115 = vmatprep.subr.mxu0 0.0
    %116 = vmatpush1.msra.mxu0 0.0
    %117 = vmatprep.subr.mxu0 0.0
    %118 = vmatpush1.msra.mxu0 0.0
    %119 = vmatprep.subr.mxu0 0.0
    %120 = vmatpush1.msra.mxu0 0.0
    %121 = vmatprep.subr.mxu0 0.0
    %122 = vmatpush1.msra.mxu0 0.0
    %123 = vmatprep.subr.mxu0 0.0
    %124 = vmatpush1.msra.mxu0 0.0
    %125 = vmatprep.subr.mxu0 0.0
    %126 = vmatpush1.msra.mxu0 0.0
    %127 = vmatprep.subr.mxu0 0.0
    %128 = vmatpush1.msra.mxu0 0.0
    %129 = vmatprep.subr.mxu0 0.0
    %130 = vmatpush1.msra.mxu0 0.0
    %131 = vmatprep.subr.mxu0 0.0
    %132 = vmatpush1.msra.mxu0 0.0
    %133 = vmatprep.subr.mxu0 0.0
    %134 = vmatpush1.msra.mxu0 0.0
    %135 = vmatprep.subr.mxu0 0.0
    %136 = vmatpush1.msra.mxu0 0.0
    %137 = vmatprep.subr.mxu0 0.0
    %138 = vmatpush1.msra.mxu0 0.0
    %139 = vmatprep.subr.mxu0 0.0
    %140 = vmatpush1.msra.mxu0 0.0
    %141 = vmatprep.subr.mxu0 0.0
    %142 = vmatpush1.msra.mxu0 0.0
    %143 = vmatprep.subr.mxu0 0.0
    %144 = vmatpush1.msra.mxu0 0.0
    %145 = vmatprep.subr.mxu0 0.0
    %146 = vmatpush1.msra.mxu0 0.0
    %147 = vmatprep.subr.mxu0 0.0
    %148 = vmatpush1.msra.mxu0 0.0
    %149 = vmatprep.subr.mxu0 0.0
    %150 = vmatpush1.msra.mxu0 0.0
    %151 = vmatprep.subr.mxu0 0.0
    %152 = vmatpush1.msra.mxu0 0.0
    %153 = vmatprep.subr.mxu0 0.0
    %154 = vmatpush1.msra.mxu0 0.0
    %155 = vmatprep.subr.mxu0 0.0
    %156 = vmatpush1.msra.mxu0 0.0
    %157 = vmatprep.subr.mxu0 0.0
    %158 = vmatpush1.msra.mxu0 0.0
    %159 = vmatprep.mubr.f32.mxu0 0.0
    %160 = vmatmul.mubr.f32.gmra.mrb[0].mxu0 %v90
    %v161 = vpop.f32.mrb[0].mxu0
    %v162 = vadd.f32 %v87, %v161
    %v163 = vpop.f32.mrb[0].mxu0
    %164 = vmatprep.mubr.f32.mxu0 0.0
    %165 = vmatmul.mubr.f32.gmra.mrb[0].mxu0 %v93
    %v166 = vpop.f32.mrb[0].mxu0
    %v167 = vadd.f32 %v87, %v166
    %v168 = vpop.f32.mrb[0].mxu0
    %169 = vdwg.mxu0
    %172 = vrot.lane.b32.xlu0 %v162, 120
    %v173 = vpop.permute.xlu0 %172
    %174 = vrot.lane.b32.xlu0 %v167, 120
    %v175 = vpop.permute.xlu0 %174
    %176 = vrot.lane.b32.xlu0 %v162, 112
    %v177 = vpop.permute.xlu0 %176
    %178 = vrot.lane.b32.xlu0 %v167, 112
    %v179 = vpop.permute.xlu0 %178
    %180 = vrot.lane.b32.xlu0 %v162, 104
    %v181 = vpop.permute.xlu0 %180
    %182 = vrot.lane.b32.xlu0 %v167, 104
    %v183 = vpop.permute.xlu0 %182
    %184 = vrot.lane.b32.xlu0 %v162, 96
    %v185 = vpop.permute.xlu0 %184
    %vm186 = vcmask 64512
    %v187 = vsel %vm186, %v162, 0
    %v189 = vsel %vm186, %v185, 0
    %191 = vmatprep.subr.mxu0 0.0
    %192 = vmatpush1.xpose.msra.mxu0 %v189
    %193 = vmatprep.subr.mxu0 0.0
    %194 = vmatpush1.xpose.msra.mxu0 0.0
    %195 = vmatprep.subr.mxu0 0.0
    %196 = vmatpush1.xpose.msra.mxu0 0.0
    %197 = vmatprep.subr.mxu0 0.0
    %198 = vmatpush1.xpose.msra.mxu0 0.0
    %199 = vmatprep.subr.mxu0 0.0
    %200 = vmatpush1.xpose.msra.mxu0 0.0
    %201 = vmatprep.subr.mxu0 0.0
    %202 = vmatpush1.xpose.msra.mxu0 0.0
    %203 = vmatprep.subr.mxu0 0.0
    %204 = vmatpush1.xpose.msra.mxu0 0.0
    %205 = vmatprep.subr.mxu0 0.0
    %206 = vmatpush1.xpose.msra.mxu0 0.0
    %207 = vmatprep.subr.mxu0 0.0
    %208 = vmatpush1.xpose.msra.mxu0 0.0
    %209 = vmatprep.subr.mxu0 0.0
    %210 = vmatpush1.xpose.msra.mxu0 0.0
    %211 = vmatprep.subr.mxu0 0.0
    %212 = vmatpush1.xpose.msra.mxu0 0.0
    %213 = vmatprep.subr.mxu0 0.0
    %214 = vmatpush1.xpose.msra.mxu0 0.0
    %215 = vmatprep.subr.mxu0 0.0
    %216 = vmatpush1.xpose.msra.mxu0 0.0
    %217 = vmatprep.subr.mxu0 0.0
    %218 = vmatpush1.xpose.msra.mxu0 0.0
    %219 = vmatprep.subr.mxu0 0.0
    %220 = vmatpush1.xpose.msra.mxu0 0.0
    %221 = vmatprep.subr.mxu0 0.0
    %222 = vmatpush1.xpose.msra.mxu0 0.0
    %223 = vmatprep.subr.mxu0 0.0
    %224 = vmatpush1.xpose.msra.mxu0 0.0
    %225 = vmatprep.subr.mxu0 0.0
    %226 = vmatpush1.xpose.msra.mxu0 0.0
    %227 = vmatprep.subr.mxu0 0.0
    %228 = vmatpush1.xpose.msra.mxu0 0.0
    %229 = vmatprep.subr.mxu0 0.0
    %230 = vmatpush1.xpose.msra.mxu0 0.0
    %231 = vmatprep.subr.mxu0 0.0
    %232 = vmatpush1.xpose.msra.mxu0 0.0
    %233 = vmatprep.subr.mxu0 0.0
    %234 = vmatpush1.xpose.msra.mxu0 0.0
    %235 = vmatprep.subr.mxu0 0.0
    %236 = vmatpush1.xpose.msra.mxu0 0.0
    %237 = vmatprep.subr.mxu0 0.0
    %238 = vmatpush1.xpose.msra.mxu0 0.0
    %239 = vmatprep.subr.mxu0 0.0
    %240 = vmatpush1.xpose.msra.mxu0 0.0
    %241 = vmatprep.subr.mxu0 0.0
    %242 = vmatpush1.xpose.msra.mxu0 0.0
    %243 = vmatprep.subr.mxu0 0.0
    %244 = vmatpush1.xpose.msra.mxu0 0.0
    %245 = vmatprep.subr.mxu0 0.0
    %246 = vmatpush1.xpose.msra.mxu0 0.0
    %247 = vmatprep.subr.mxu0 0.0
    %248 = vmatpush1.xpose.msra.mxu0 0.0
    %249 = vmatprep.subr.mxu0 0.0
    %250 = vmatpush1.xpose.msra.mxu0 0.0
    %251 = vmatprep.subr.mxu0 0.0
    %252 = vmatpush1.xpose.msra.mxu0 0.0
    %253 = vmatprep.subr.mxu0 0.0
    %254 = vmatpush1.xpose.msra.mxu0 0.0
    %255 = vmatprep.mubr.f32.mxu0 0.0
    %256 = vmatmul.mubr.f32.gmra.mrb[0].mxu0 %v187
    %v257 = vpop.f32.mrb[0].mxu0
    %v258 = vadd.f32 0.0, %v257
    %v259 = vpop.f32.mrb[0].mxu0
    %260 = vdwg.mxu0
    %261 = vrot.lane.b32.xlu0 %v167, 96
    %v262 = vpop.permute.xlu0 %261
    %v263 = vsel %vm186, %v167, 0
    %v265 = vsel %vm186, %v262, 0
    %267 = vmatprep.subr.mxu0 0.0
    %268 = vmatpush1.xpose.msra.mxu0 %v265
    %269 = vmatprep.subr.mxu0 0.0
    %270 = vmatpush1.xpose.msra.mxu0 0.0
    %271 = vmatprep.subr.mxu0 0.0
    %272 = vmatpush1.xpose.msra.mxu0 0.0
    %273 = vmatprep.subr.mxu0 0.0
    %274 = vmatpush1.xpose.msra.mxu0 0.0
    %275 = vmatprep.subr.mxu0 0.0
    %276 = vmatpush1.xpose.msra.mxu0 0.0
    %277 = vmatprep.subr.mxu0 0.0
    %278 = vmatpush1.xpose.msra.mxu0 0.0
    %279 = vmatprep.subr.mxu0 0.0
    %280 = vmatpush1.xpose.msra.mxu0 0.0
    %281 = vmatprep.subr.mxu0 0.0
    %282 = vmatpush1.xpose.msra.mxu0 0.0
    %283 = vmatprep.subr.mxu0 0.0
    %284 = vmatpush1.xpose.msra.mxu0 0.0
    %285 = vmatprep.subr.mxu0 0.0
    %286 = vmatpush1.xpose.msra.mxu0 0.0
    %287 = vmatprep.subr.mxu0 0.0
    %288 = vmatpush1.xpose.msra.mxu0 0.0
    %289 = vmatprep.subr.mxu0 0.0
    %290 = vmatpush1.xpose.msra.mxu0 0.0
    %291 = vmatprep.subr.mxu0 0.0
    %292 = vmatpush1.xpose.msra.mxu0 0.0
    %293 = vmatprep.subr.mxu0 0.0
    %294 = vmatpush1.xpose.msra.mxu0 0.0
    %295 = vmatprep.subr.mxu0 0.0
    %296 = vmatpush1.xpose.msra.mxu0 0.0
    %297 = vmatprep.subr.mxu0 0.0
    %298 = vmatpush1.xpose.msra.mxu0 0.0
    %299 = vmatprep.subr.mxu0 0.0
    %300 = vmatpush1.xpose.msra.mxu0 0.0
    %301 = vmatprep.subr.mxu0 0.0
    %302 = vmatpush1.xpose.msra.mxu0 0.0
    %303 = vmatprep.subr.mxu0 0.0
    %304 = vmatpush1.xpose.msra.mxu0 0.0
    %305 = vmatprep.subr.mxu0 0.0
    %306 = vmatpush1.xpose.msra.mxu0 0.0
    %307 = vmatprep.subr.mxu0 0.0
    %308 = vmatpush1.xpose.msra.mxu0 0.0
    %309 = vmatprep.subr.mxu0 0.0
    %310 = vmatpush1.xpose.msra.mxu0 0.0
    %311 = vmatprep.subr.mxu0 0.0
    %312 = vmatpush1.xpose.msra.mxu0 0.0
    %313 = vmatprep.subr.mxu0 0.0
    %314 = vmatpush1.xpose.msra.mxu0 0.0
    %315 = vmatprep.subr.mxu0 0.0
    %316 = vmatpush1.xpose.msra.mxu0 0.0
    %317 = vmatprep.subr.mxu0 0.0
    %318 = vmatpush1.xpose.msra.mxu0 0.0
    %319 = vmatprep.subr.mxu0 0.0
    %320 = vmatpush1.xpose.msra.mxu0 0.0
    %321 = vmatprep.subr.mxu0 0.0
    %322 = vmatpush1.xpose.msra.mxu0 0.0
    %323 = vmatprep.subr.mxu0 0.0
    %324 = vmatpush1.xpose.msra.mxu0 0.0
    %325 = vmatprep.subr.mxu0 0.0
    %326 = vmatpush1.xpose.msra.mxu0 0.0
    %327 = vmatprep.subr.mxu0 0.0
    %328 = vmatpush1.xpose.msra.mxu0 0.0
    %329 = vmatprep.subr.mxu0 0.0
    %330 = vmatpush1.xpose.msra.mxu0 0.0
    %331 = vmatprep.mubr.f32.mxu0 0.0
    %332 = vmatmul.mubr.f32.gmra.mrb[0].mxu0 %v263
    %v333 = vpop.f32.mrb[0].mxu0
    %v334 = vadd.f32 0.0, %v333
    %v335 = vpop.f32.mrb[0].mxu0
    %336 = vdwg.mxu0
    %337 = vrot.lane.b32.xlu0 %v173, 96
    %v338 = vpop.permute.xlu0 %337
    %v339 = vsel %vm186, %v173, 0
    %v341 = vsel %vm186, %v338, 0
    %343 = vmatprep.subr.mxu0 0.0
    %344 = vmatpush1.xpose.msra.mxu0 %v341
    %345 = vmatprep.subr.mxu0 0.0
    %346 = vmatpush1.xpose.msra.mxu0 0.0
    %347 = vmatprep.subr.mxu0 0.0
    %348 = vmatpush1.xpose.msra.mxu0 0.0
    %349 = vmatprep.subr.mxu0 0.0
    %350 = vmatpush1.xpose.msra.mxu0 0.0
    %351 = vmatprep.subr.mxu0 0.0
    %352 = vmatpush1.xpose.msra.mxu0 0.0
    %353 = vmatprep.subr.mxu0 0.0
    %354 = vmatpush1.xpose.msra.mxu0 0.0
    %355 = vmatprep.subr.mxu0 0.0
    %356 = vmatpush1.xpose.msra.mxu0 0.0
    %357 = vmatprep.subr.mxu0 0.0
    %358 = vmatpush1.xpose.msra.mxu0 0.0
    %359 = vmatprep.subr.mxu0 0.0
    %360 = vmatpush1.xpose.msra.mxu0 0.0
    %361 = vmatprep.subr.mxu0 0.0
    %362 = vmatpush1.xpose.msra.mxu0 0.0
    %363 = vmatprep.subr.mxu0 0.0
    %364 = vmatpush1.xpose.msra.mxu0 0.0
    %365 = vmatprep.subr.mxu0 0.0
    %366 = vmatpush1.xpose.msra.mxu0 0.0
    %367 = vmatprep.subr.mxu0 0.0
    %368 = vmatpush1.xpose.msra.mxu0 0.0
    %369 = vmatprep.subr.mxu0 0.0
    %370 = vmatpush1.xpose.msra.mxu0 0.0
    %371 = vmatprep.subr.mxu0 0.0
    %372 = vmatpush1.xpose.msra.mxu0 0.0
    %373 = vmatprep.subr.mxu0 0.0
    %374 = vmatpush1.xpose.msra.mxu0 0.0
    %375 = vmatprep.subr.mxu0 0.0
    %376 = vmatpush1.xpose.msra.mxu0 0.0
    %377 = vmatprep.subr.mxu0 0.0
    %378 = vmatpush1.xpose.msra.mxu0 0.0
    %379 = vmatprep.subr.mxu0 0.0
    %380 = vmatpush1.xpose.msra.mxu0 0.0
    %381 = vmatprep.subr.mxu0 0.0
    %382 = vmatpush1.xpose.msra.mxu0 0.0
    %383 = vmatprep.subr.mxu0 0.0
    %384 = vmatpush1.xpose.msra.mxu0 0.0
    %385 = vmatprep.subr.mxu0 0.0
    %386 = vmatpush1.xpose.msra.mxu0 0.0
    %387 = vmatprep.subr.mxu0 0.0
    %388 = vmatpush1.xpose.msra.mxu0 0.0
    %389 = vmatprep.subr.mxu0 0.0
    %390 = vmatpush1.xpose.msra.mxu0 0.0
    %391 = vmatprep.subr.mxu0 0.0
    %392 = vmatpush1.xpose.msra.mxu0 0.0
    %393 = vmatprep.subr.mxu0 0.0
    %394 = vmatpush1.xpose.msra.mxu0 0.0
    %395 = vmatprep.subr.mxu0 0.0
    %396 = vmatpush1.xpose.msra.mxu0 0.0
    %397 = vmatprep.subr.mxu0 0.0
    %398 = vmatpush1.xpose.msra.mxu0 0.0
    %399 = vmatprep.subr.mxu0 0.0
    %400 = vmatpush1.xpose.msra.mxu0 0.0
    %401 = vmatprep.subr.mxu0 0.0
    %402 = vmatpush1.xpose.msra.mxu0 0.0
    %403 = vmatprep.subr.mxu0 0.0
    %404 = vmatpush1.xpose.msra.mxu0 0.0
    %405 = vmatprep.subr.mxu0 0.0
    %406 = vmatpush1.xpose.msra.mxu0 0.0
    %407 = vmatprep.mubr.f32.mxu0 0.0
    %408 = vmatmul.mubr.f32.gmra.mrb[0].mxu0 %v339
    %v409 = vpop.f32.mrb[0].mxu0
    %v410 = vadd.f32 0.0, %v409
    %v411 = vpop.f32.mrb[0].mxu0
    %412 = vdwg.mxu0
    %413 = vrot.lane.b32.xlu0 %v175, 96
    %v414 = vpop.permute.xlu0 %413
    %v415 = vsel %vm186, %v175, 0
    %v417 = vsel %vm186, %v414, 0
    %419 = vmatprep.subr.mxu0 0.0
    %420 = vmatpush1.xpose.msra.mxu0 %v417
    %421 = vmatprep.subr.mxu0 0.0
    %422 = vmatpush1.xpose.msra.mxu0 0.0
    %423 = vmatprep.subr.mxu0 0.0
    %424 = vmatpush1.xpose.msra.mxu0 0.0
    %425 = vmatprep.subr.mxu0 0.0
    %426 = vmatpush1.xpose.msra.mxu0 0.0
    %427 = vmatprep.subr.mxu0 0.0
    %428 = vmatpush1.xpose.msra.mxu0 0.0
    %429 = vmatprep.subr.mxu0 0.0
    %430 = vmatpush1.xpose.msra.mxu0 0.0
    %431 = vmatprep.subr.mxu0 0.0
    %432 = vmatpush1.xpose.msra.mxu0 0.0
    %433 = vmatprep.subr.mxu0 0.0
    %434 = vmatpush1.xpose.msra.mxu0 0.0
    %435 = vmatprep.subr.mxu0 0.0
    %436 = vmatpush1.xpose.msra.mxu0 0.0
    %437 = vmatprep.subr.mxu0 0.0
    %438 = vmatpush1.xpose.msra.mxu0 0.0
    %439 = vmatprep.subr.mxu0 0.0
    %440 = vmatpush1.xpose.msra.mxu0 0.0
    %441 = vmatprep.subr.mxu0 0.0
    %442 = vmatpush1.xpose.msra.mxu0 0.0
    %443 = vmatprep.subr.mxu0 0.0
    %444 = vmatpush1.xpose.msra.mxu0 0.0
    %445 = vmatprep.subr.mxu0 0.0
    %446 = vmatpush1.xpose.msra.mxu0 0.0
    %447 = vmatprep.subr.mxu0 0.0
    %448 = vmatpush1.xpose.msra.mxu0 0.0
    %449 = vmatprep.subr.mxu0 0.0
    %450 = vmatpush1.xpose.msra.mxu0 0.0
    %451 = vmatprep.subr.mxu0 0.0
    %452 = vmatpush1.xpose.msra.mxu0 0.0
    %453 = vmatprep.subr.mxu0 0.0
    %454 = vmatpush1.xpose.msra.mxu0 0.0
    %455 = vmatprep.subr.mxu0 0.0
    %456 = vmatpush1.xpose.msra.mxu0 0.0
    %457 = vmatprep.subr.mxu0 0.0
    %458 = vmatpush1.xpose.msra.mxu0 0.0
    %459 = vmatprep.subr.mxu0 0.0
    %460 = vmatpush1.xpose.msra.mxu0 0.0
    %461 = vmatprep.subr.mxu0 0.0
    %462 = vmatpush1.xpose.msra.mxu0 0.0
    %463 = vmatprep.subr.mxu0 0.0
    %464 = vmatpush1.xpose.msra.mxu0 0.0
    %465 = vmatprep.subr.mxu0 0.0
    %466 = vmatpush1.xpose.msra.mxu0 0.0
    %467 = vmatprep.subr.mxu0 0.0
    %468 = vmatpush1.xpose.msra.mxu0 0.0
    %469 = vmatprep.subr.mxu0 0.0
    %470 = vmatpush1.xpose.msra.mxu0 0.0
    %471 = vmatprep.subr.mxu0 0.0
    %472 = vmatpush1.xpose.msra.mxu0 0.0
    %473 = vmatprep.subr.mxu0 0.0
    %474 = vmatpush1.xpose.msra.mxu0 0.0
    %475 = vmatprep.subr.mxu0 0.0
    %476 = vmatpush1.xpose.msra.mxu0 0.0
    %477 = vmatprep.subr.mxu0 0.0
    %478 = vmatpush1.xpose.msra.mxu0 0.0
    %479 = vmatprep.subr.mxu0 0.0
    %480 = vmatpush1.xpose.msra.mxu0 0.0
    %481 = vmatprep.subr.mxu0 0.0
    %482 = vmatpush1.xpose.msra.mxu0 0.0
    %483 = vmatprep.mubr.f32.mxu0 0.0
    %484 = vmatmul.mubr.f32.gmra.mrb[0].mxu0 %v415
    %v485 = vpop.f32.mrb[0].mxu0
    %v486 = vadd.f32 0.0, %v485
    %v487 = vpop.f32.mrb[0].mxu0
    %488 = vdwg.mxu0
    %489 = vrot.lane.b32.xlu0 %v177, 96
    %v490 = vpop.permute.xlu0 %489
    %v491 = vsel %vm186, %v177, 0
    %v493 = vsel %vm186, %v490, 0
    %495 = vmatprep.subr.mxu0 0.0
    %496 = vmatpush1.xpose.msra.mxu0 %v493
    %497 = vmatprep.subr.mxu0 0.0
    %498 = vmatpush1.xpose.msra.mxu0 0.0
    %499 = vmatprep.subr.mxu0 0.0
    %500 = vmatpush1.xpose.msra.mxu0 0.0
    %501 = vmatprep.subr.mxu0 0.0
    %502 = vmatpush1.xpose.msra.mxu0 0.0
    %503 = vmatprep.subr.mxu0 0.0
    %504 = vmatpush1.xpose.msra.mxu0 0.0
    %505 = vmatprep.subr.mxu0 0.0
    %506 = vmatpush1.xpose.msra.mxu0 0.0
    %507 = vmatprep.subr.mxu0 0.0
    %508 = vmatpush1.xpose.msra.mxu0 0.0
    %509 = vmatprep.subr.mxu0 0.0
    %510 = vmatpush1.xpose.msra.mxu0 0.0
    %511 = vmatprep.subr.mxu0 0.0
    %512 = vmatpush1.xpose.msra.mxu0 0.0
    %513 = vmatprep.subr.mxu0 0.0
    %514 = vmatpush1.xpose.msra.mxu0 0.0
    %515 = vmatprep.subr.mxu0 0.0
    %516 = vmatpush1.xpose.msra.mxu0 0.0
    %517 = vmatprep.subr.mxu0 0.0
    %518 = vmatpush1.xpose.msra.mxu0 0.0
    %519 = vmatprep.subr.mxu0 0.0
    %520 = vmatpush1.xpose.msra.mxu0 0.0
    %521 = vmatprep.subr.mxu0 0.0
    %522 = vmatpush1.xpose.msra.mxu0 0.0
    %523 = vmatprep.subr.mxu0 0.0
    %524 = vmatpush1.xpose.msra.mxu0 0.0
    %525 = vmatprep.subr.mxu0 0.0
    %526 = vmatpush1.xpose.msra.mxu0 0.0
    %527 = vmatprep.subr.mxu0 0.0
    %528 = vmatpush1.xpose.msra.mxu0 0.0
    %529 = vmatprep.subr.mxu0 0.0
    %530 = vmatpush1.xpose.msra.mxu0 0.0
    %531 = vmatprep.subr.mxu0 0.0
    %532 = vmatpush1.xpose.msra.mxu0 0.0
    %533 = vmatprep.subr.mxu0 0.0
    %534 = vmatpush1.xpose.msra.mxu0 0.0
    %535 = vmatprep.subr.mxu0 0.0
    %536 = vmatpush1.xpose.msra.mxu0 0.0
    %537 = vmatprep.subr.mxu0 0.0
    %538 = vmatpush1.xpose.msra.mxu0 0.0
    %539 = vmatprep.subr.mxu0 0.0
    %540 = vmatpush1.xpose.msra.mxu0 0.0
    %541 = vmatprep.subr.mxu0 0.0
    %542 = vmatpush1.xpose.msra.mxu0 0.0
    %543 = vmatprep.subr.mxu0 0.0
    %544 = vmatpush1.xpose.msra.mxu0 0.0
    %545 = vmatprep.subr.mxu0 0.0
    %546 = vmatpush1.xpose.msra.mxu0 0.0
    %547 = vmatprep.subr.mxu0 0.0
    %548 = vmatpush1.xpose.msra.mxu0 0.0
    %549 = vmatprep.subr.mxu0 0.0
    %550 = vmatpush1.xpose.msra.mxu0 0.0
    %551 = vmatprep.subr.mxu0 0.0
    %552 = vmatpush1.xpose.msra.mxu0 0.0
    %553 = vmatprep.subr.mxu0 0.0
    %554 = vmatpush1.xpose.msra.mxu0 0.0
    %555 = vmatprep.subr.mxu0 0.0
    %556 = vmatpush1.xpose.msra.mxu0 0.0
    %557 = vmatprep.subr.mxu0 0.0
    %558 = vmatpush1.xpose.msra.mxu0 0.0
    %559 = vmatprep.mubr.f32.mxu0 0.0
    %560 = vmatmul.mubr.f32.gmra.mrb[0].mxu0 %v491
    %v561 = vpop.f32.mrb[0].mxu0
    %v562 = vadd.f32 0.0, %v561
    %v563 = vpop.f32.mrb[0].mxu0
    %564 = vdwg.mxu0
    %565 = vrot.lane.b32.xlu0 %v179, 96
    %v566 = vpop.permute.xlu0 %565
    %v567 = vsel %vm186, %v179, 0
    %v569 = vsel %vm186, %v566, 0
    %571 = vmatprep.subr.mxu0 0.0
    %572 = vmatpush1.xpose.msra.mxu0 %v569
    %573 = vmatprep.subr.mxu0 0.0
    %574 = vmatpush1.xpose.msra.mxu0 0.0
    %575 = vmatprep.subr.mxu0 0.0
    %576 = vmatpush1.xpose.msra.mxu0 0.0
    %577 = vmatprep.subr.mxu0 0.0
    %578 = vmatpush1.xpose.msra.mxu0 0.0
    %579 = vmatprep.subr.mxu0 0.0
    %580 = vmatpush1.xpose.msra.mxu0 0.0
    %581 = vmatprep.subr.mxu0 0.0
    %582 = vmatpush1.xpose.msra.mxu0 0.0
    %583 = vmatprep.subr.mxu0 0.0
    %584 = vmatpush1.xpose.msra.mxu0 0.0
    %585 = vmatprep.subr.mxu0 0.0
    %586 = vmatpush1.xpose.msra.mxu0 0.0
    %587 = vmatprep.subr.mxu0 0.0
    %588 = vmatpush1.xpose.msra.mxu0 0.0
    %589 = vmatprep.subr.mxu0 0.0
    %590 = vmatpush1.xpose.msra.mxu0 0.0
    %591 = vmatprep.subr.mxu0 0.0
    %592 = vmatpush1.xpose.msra.mxu0 0.0
    %593 = vmatprep.subr.mxu0 0.0
    %594 = vmatpush1.xpose.msra.mxu0 0.0
    %595 = vmatprep.subr.mxu0 0.0
    %596 = vmatpush1.xpose.msra.mxu0 0.0
    %597 = vmatprep.subr.mxu0 0.0
    %598 = vmatpush1.xpose.msra.mxu0 0.0
    %599 = vmatprep.subr.mxu0 0.0
    %600 = vmatpush1.xpose.msra.mxu0 0.0
    %601 = vmatprep.subr.mxu0 0.0
    %602 = vmatpush1.xpose.msra.mxu0 0.0
    %603 = vmatprep.subr.mxu0 0.0
    %604 = vmatpush1.xpose.msra.mxu0 0.0
    %605 = vmatprep.subr.mxu0 0.0
    %606 = vmatpush1.xpose.msra.mxu0 0.0
    %607 = vmatprep.subr.mxu0 0.0
    %608 = vmatpush1.xpose.msra.mxu0 0.0
    %609 = vmatprep.subr.mxu0 0.0
    %610 = vmatpush1.xpose.msra.mxu0 0.0
    %611 = vmatprep.subr.mxu0 0.0
    %612 = vmatpush1.xpose.msra.mxu0 0.0
    %613 = vmatprep.subr.mxu0 0.0
    %614 = vmatpush1.xpose.msra.mxu0 0.0
    %615 = vmatprep.subr.mxu0 0.0
    %616 = vmatpush1.xpose.msra.mxu0 0.0
    %617 = vmatprep.subr.mxu0 0.0
    %618 = vmatpush1.xpose.msra.mxu0 0.0
    %619 = vmatprep.subr.mxu0 0.0
    %620 = vmatpush1.xpose.msra.mxu0 0.0
    %621 = vmatprep.subr.mxu0 0.0
    %622 = vmatpush1.xpose.msra.mxu0 0.0
    %623 = vmatprep.subr.mxu0 0.0
    %624 = vmatpush1.xpose.msra.mxu0 0.0
    %625 = vmatprep.subr.mxu0 0.0
    %626 = vmatpush1.xpose.msra.mxu0 0.0
    %627 = vmatprep.subr.mxu0 0.0
    %628 = vmatpush1.xpose.msra.mxu0 0.0
    %629 = vmatprep.subr.mxu0 0.0
    %630 = vmatpush1.xpose.msra.mxu0 0.0
    %631 = vmatprep.subr.mxu0 0.0
    %632 = vmatpush1.xpose.msra.mxu0 0.0
    %633 = vmatprep.subr.mxu0 0.0
    %634 = vmatpush1.xpose.msra.mxu0 0.0
    %635 = vmatprep.mubr.f32.mxu0 0.0
    %636 = vmatmul.mubr.f32.gmra.mrb[0].mxu0 %v567
    %v637 = vpop.f32.mrb[0].mxu0
    %v638 = vadd.f32 0.0, %v637
    %v639 = vpop.f32.mrb[0].mxu0
    %640 = vdwg.mxu0
    %641 = vrot.lane.b32.xlu0 %v181, 96
    %v642 = vpop.permute.xlu0 %641
    %v643 = vsel %vm186, %v181, 0
    %v645 = vsel %vm186, %v642, 0
    %647 = vmatprep.subr.mxu0 0.0
    %648 = vmatpush1.xpose.msra.mxu0 %v645
    %649 = vmatprep.subr.mxu0 0.0
    %650 = vmatpush1.xpose.msra.mxu0 0.0
    %651 = vmatprep.subr.mxu0 0.0
    %652 = vmatpush1.xpose.msra.mxu0 0.0
    %653 = vmatprep.subr.mxu0 0.0
    %654 = vmatpush1.xpose.msra.mxu0 0.0
    %655 = vmatprep.subr.mxu0 0.0
    %656 = vmatpush1.xpose.msra.mxu0 0.0
    %657 = vmatprep.subr.mxu0 0.0
    %658 = vmatpush1.xpose.msra.mxu0 0.0
    %659 = vmatprep.subr.mxu0 0.0
    %660 = vmatpush1.xpose.msra.mxu0 0.0
    %661 = vmatprep.subr.mxu0 0.0
    %662 = vmatpush1.xpose.msra.mxu0 0.0
    %663 = vmatprep.subr.mxu0 0.0
    %664 = vmatpush1.xpose.msra.mxu0 0.0
    %665 = vmatprep.subr.mxu0 0.0
    %666 = vmatpush1.xpose.msra.mxu0 0.0
    %667 = vmatprep.subr.mxu0 0.0
    %668 = vmatpush1.xpose.msra.mxu0 0.0
    %669 = vmatprep.subr.mxu0 0.0
    %670 = vmatpush1.xpose.msra.mxu0 0.0
    %671 = vmatprep.subr.mxu0 0.0
    %672 = vmatpush1.xpose.msra.mxu0 0.0
    %673 = vmatprep.subr.mxu0 0.0
    %674 = vmatpush1.xpose.msra.mxu0 0.0
    %675 = vmatprep.subr.mxu0 0.0
    %676 = vmatpush1.xpose.msra.mxu0 0.0
    %677 = vmatprep.subr.mxu0 0.0
    %678 = vmatpush1.xpose.msra.mxu0 0.0
    %679 = vmatprep.subr.mxu0 0.0
    %680 = vmatpush1.xpose.msra.mxu0 0.0
    %681 = vmatprep.subr.mxu0 0.0
    %682 = vmatpush1.xpose.msra.mxu0 0.0
    %683 = vmatprep.subr.mxu0 0.0
    %684 = vmatpush1.xpose.msra.mxu0 0.0
    %685 = vmatprep.subr.mxu0 0.0
    %686 = vmatpush1.xpose.msra.mxu0 0.0
    %687 = vmatprep.subr.mxu0 0.0
    %688 = vmatpush1.xpose.msra.mxu0 0.0
    %689 = vmatprep.subr.mxu0 0.0
    %690 = vmatpush1.xpose.msra.mxu0 0.0
    %691 = vmatprep.subr.mxu0 0.0
    %692 = vmatpush1.xpose.msra.mxu0 0.0
    %693 = vmatprep.subr.mxu0 0.0
    %694 = vmatpush1.xpose.msra.mxu0 0.0
    %695 = vmatprep.subr.mxu0 0.0
    %696 = vmatpush1.xpose.msra.mxu0 0.0
    %697 = vmatprep.subr.mxu0 0.0
    %698 = vmatpush1.xpose.msra.mxu0 0.0
    %699 = vmatprep.subr.mxu0 0.0
    %700 = vmatpush1.xpose.msra.mxu0 0.0
    %701 = vmatprep.subr.mxu0 0.0
    %702 = vmatpush1.xpose.msra.mxu0 0.0
    %703 = vmatprep.subr.mxu0 0.0
    %704 = vmatpush1.xpose.msra.mxu0 0.0
    %705 = vmatprep.subr.mxu0 0.0
    %706 = vmatpush1.xpose.msra.mxu0 0.0
    %707 = vmatprep.subr.mxu0 0.0
    %708 = vmatpush1.xpose.msra.mxu0 0.0
    %709 = vmatprep.subr.mxu0 0.0
    %710 = vmatpush1.xpose.msra.mxu0 0.0
    %711 = vmatprep.mubr.f32.mxu0 0.0
    %712 = vmatmul.mubr.f32.gmra.mrb[0].mxu0 %v643
    %v713 = vpop.f32.mrb[0].mxu0
    %v714 = vadd.f32 0.0, %v713
    %v715 = vpop.f32.mrb[0].mxu0
    %716 = vdwg.mxu0
    %717 = vrot.lane.b32.xlu0 %v183, 96
    %v718 = vpop.permute.xlu0 %717
    %v719 = vsel %vm186, %v183, 0
    %v721 = vsel %vm186, %v718, 0
    %723 = vmatprep.subr.mxu0 0.0
    %724 = vmatpush1.xpose.msra.mxu0 %v721
    %725 = vmatprep.subr.mxu0 0.0
    %726 = vmatpush1.xpose.msra.mxu0 0.0
    %727 = vmatprep.subr.mxu0 0.0
    %728 = vmatpush1.xpose.msra.mxu0 0.0
    %729 = vmatprep.subr.mxu0 0.0
    %730 = vmatpush1.xpose.msra.mxu0 0.0
    %731 = vmatprep.subr.mxu0 0.0
    %732 = vmatpush1.xpose.msra.mxu0 0.0
    %733 = vmatprep.subr.mxu0 0.0
    %734 = vmatpush1.xpose.msra.mxu0 0.0
    %735 = vmatprep.subr.mxu0 0.0
    %736 = vmatpush1.xpose.msra.mxu0 0.0
    %737 = vmatprep.subr.mxu0 0.0
    %738 = vmatpush1.xpose.msra.mxu0 0.0
    %739 = vmatprep.subr.mxu0 0.0
    %740 = vmatpush1.xpose.msra.mxu0 0.0
    %741 = vmatprep.subr.mxu0 0.0
    %742 = vmatpush1.xpose.msra.mxu0 0.0
    %743 = vmatprep.subr.mxu0 0.0
    %744 = vmatpush1.xpose.msra.mxu0 0.0
    %745 = vmatprep.subr.mxu0 0.0
    %746 = vmatpush1.xpose.msra.mxu0 0.0
    %747 = vmatprep.subr.mxu0 0.0
    %748 = vmatpush1.xpose.msra.mxu0 0.0
    %749 = vmatprep.subr.mxu0 0.0
    %750 = vmatpush1.xpose.msra.mxu0 0.0
    %751 = vmatprep.subr.mxu0 0.0
    %752 = vmatpush1.xpose.msra.mxu0 0.0
    %753 = vmatprep.subr.mxu0 0.0
    %754 = vmatpush1.xpose.msra.mxu0 0.0
    %755 = vmatprep.subr.mxu0 0.0
    %756 = vmatpush1.xpose.msra.mxu0 0.0
    %757 = vmatprep.subr.mxu0 0.0
    %758 = vmatpush1.xpose.msra.mxu0 0.0
    %759 = vmatprep.subr.mxu0 0.0
    %760 = vmatpush1.xpose.msra.mxu0 0.0
    %761 = vmatprep.subr.mxu0 0.0
    %762 = vmatpush1.xpose.msra.mxu0 0.0
    %763 = vmatprep.subr.mxu0 0.0
    %764 = vmatpush1.xpose.msra.mxu0 0.0
    %765 = vmatprep.subr.mxu0 0.0
    %766 = vmatpush1.xpose.msra.mxu0 0.0
    %767 = vmatprep.subr.mxu0 0.0
    %768 = vmatpush1.xpose.msra.mxu0 0.0
    %769 = vmatprep.subr.mxu0 0.0
    %770 = vmatpush1.xpose.msra.mxu0 0.0
    %771 = vmatprep.subr.mxu0 0.0
    %772 = vmatpush1.xpose.msra.mxu0 0.0
    %773 = vmatprep.subr.mxu0 0.0
    %774 = vmatpush1.xpose.msra.mxu0 0.0
    %775 = vmatprep.subr.mxu0 0.0
    %776 = vmatpush1.xpose.msra.mxu0 0.0
    %777 = vmatprep.subr.mxu0 0.0
    %778 = vmatpush1.xpose.msra.mxu0 0.0
    %779 = vmatprep.subr.mxu0 0.0
    %780 = vmatpush1.xpose.msra.mxu0 0.0
    %781 = vmatprep.subr.mxu0 0.0
    %782 = vmatpush1.xpose.msra.mxu0 0.0
    %783 = vmatprep.subr.mxu0 0.0
    %784 = vmatpush1.xpose.msra.mxu0 0.0
    %785 = vmatprep.subr.mxu0 0.0
    %786 = vmatpush1.xpose.msra.mxu0 0.0
    %787 = vmatprep.mubr.f32.mxu0 0.0
    %788 = vmatmul.mubr.f32.gmra.mrb[0].mxu0 %v719
    %v789 = vpop.f32.mrb[0].mxu0
    %v790 = vadd.f32 0.0, %v789
    %v791 = vpop.f32.mrb[0].mxu0
    %792 = vdwg.mxu0
    %v793 = vsel %vm186, %v258, -inf
    %794 = vmax.xlane.f32.xlu0 %v793
    %v795 = vpop.xlane.xlu0 %794
    %v796 = vsel %vm186, %v334, -inf
    %797 = vmax.xlane.f32.xlu0 %v796
    %v798 = vpop.xlane.xlu0 %797
    %v799 = vsel %vm186, %v410, -inf
    %800 = vmax.xlane.f32.xlu0 %v799
    %v801 = vpop.xlane.xlu0 %800
    %v802 = vsel %vm186, %v486, -inf
    %803 = vmax.xlane.f32.xlu0 %v802
    %v804 = vpop.xlane.xlu0 %803
    %v805 = vsel %vm186, %v562, -inf
    %806 = vmax.xlane.f32.xlu0 %v805
    %v807 = vpop.xlane.xlu0 %806
    %v808 = vsel %vm186, %v638, -inf
    %809 = vmax.xlane.f32.xlu0 %v808
    %v810 = vpop.xlane.xlu0 %809
    %v811 = vsel %vm186, %v714, -inf
    %812 = vmax.xlane.f32.xlu0 %v811
    %v813 = vpop.xlane.xlu0 %812
    %v814 = vsel %vm186, %v790, -inf
    %815 = vmax.xlane.f32.xlu0 %v814
    %v816 = vpop.xlane.xlu0 %815
    %v817 = vsub.f32 %v258, %v795
    %v818 = vsub.f32 %v334, %v798
    %v819 = vsub.f32 %v410, %v801
    %v820 = vsub.f32 %v486, %v804
    %v821 = vsub.f32 %v562, %v807
    %v822 = vsub.f32 %v638, %v810
    %v823 = vsub.f32 %v714, %v813
    %v824 = vsub.f32 %v790, %v816
    %v825 = vmul.f32 %v817, 1.442695
    %v826 = vpow.pop %v825
    %v827 = vmul.f32 %v818, 1.442695
    %v828 = vpow.pop %v827
    %v829 = vmul.f32 %v819, 1.442695
    %v830 = vpow.pop %v829
    %v831 = vmul.f32 %v820, 1.442695
    %v832 = vpow.pop %v831
    %v833 = vmul.f32 %v821, 1.442695
    %v834 = vpow.pop %v833
    %v835 = vmul.f32 %v822, 1.442695
    %v836 = vpow.pop %v835
    %v837 = vmul.f32 %v823, 1.442695
    %v838 = vpow.pop %v837
    %v839 = vmul.f32 %v824, 1.442695
    %v840 = vpow.pop %v839
    %v841 = vsel %vm186, %v826, 0.0
    %842 = vadd.xlane.f32.xlu0 %v841
    %v843 = vpop.xlane.xlu0 %842
    %v844 = vsel %vm186, %v828, 0.0
    %845 = vadd.xlane.f32.xlu0 %v844
    %v846 = vpop.xlane.xlu0 %845
    %v847 = vsel %vm186, %v830, 0.0
    %848 = vadd.xlane.f32.xlu0 %v847
    %v849 = vpop.xlane.xlu0 %848
    %v850 = vsel %vm186, %v832, 0.0
    %851 = vadd.xlane.f32.xlu0 %v850
    %v852 = vpop.xlane.xlu0 %851
    %v853 = vsel %vm186, %v834, 0.0
    %854 = vadd.xlane.f32.xlu0 %v853
    %v855 = vpop.xlane.xlu0 %854
    %v856 = vsel %vm186, %v836, 0.0
    %857 = vadd.xlane.f32.xlu0 %v856
    %v858 = vpop.xlane.xlu0 %857
    %v859 = vsel %vm186, %v838, 0.0
    %860 = vadd.xlane.f32.xlu0 %v859
    %v861 = vpop.xlane.xlu0 %860
    %v862 = vsel %vm186, %v840, 0.0
    %863 = vadd.xlane.f32.xlu0 %v862
    %v864 = vpop.xlane.xlu0 %863
    %v865 = vrcp.pop %v843
    %v866 = vmul.f32 %v826, %v865
    %v867 = vrcp.pop %v846
    %v868 = vmul.f32 %v828, %v867
    %v869 = vrcp.pop %v849
    %v870 = vmul.f32 %v830, %v869
    %v871 = vrcp.pop %v852
    %v872 = vmul.f32 %v832, %v871
    %v873 = vrcp.pop %v855
    %v874 = vmul.f32 %v834, %v873
    %v875 = vrcp.pop %v858
    %v876 = vmul.f32 %v836, %v875
    %v877 = vrcp.pop %v861
    %v878 = vmul.f32 %v838, %v877
    %v879 = vrcp.pop %v864
    %v880 = vmul.f32 %v840, %v879
    %881 = vrot.lane.b32.xlu0 %v162, 64
    %v882 = vpop.permute.xlu0 %881
    %v885 = vsel %vm186, %v866, 0
    %887 = vmatprep.subr.mxu0 0.0
    %888 = vmatpush1.msra.mxu0 %v882
    %889 = vmatprep.subr.mxu0 0.0
    %890 = vmatpush1.msra.mxu0 0.0
    %891 = vmatprep.subr.mxu0 0.0
    %892 = vmatpush1.msra.mxu0 0.0
    %893 = vmatprep.subr.mxu0 0.0
    %894 = vmatpush1.msra.mxu0 0.0
    %895 = vmatprep.subr.mxu0 0.0
    %896 = vmatpush1.msra.mxu0 0.0
    %897 = vmatprep.subr.mxu0 0.0
    %898 = vmatpush1.msra.mxu0 0.0
    %899 = vmatprep.subr.mxu0 0.0
    %900 = vmatpush1.msra.mxu0 0.0
    %901 = vmatprep.subr.mxu0 0.0
    %902 = vmatpush1.msra.mxu0 0.0
    %903 = vmatprep.subr.mxu0 0.0
    %904 = vmatpush1.msra.mxu0 0.0
    %905 = vmatprep.subr.mxu0 0.0
    %906 = vmatpush1.msra.mxu0 0.0
    %907 = vmatprep.subr.mxu0 0.0
    %908 = vmatpush1.msra.mxu0 0.0
    %909 = vmatprep.subr.mxu0 0.0
    %910 = vmatpush1.msra.mxu0 0.0
    %911 = vmatprep.subr.mxu0 0.0
    %912 = vmatpush1.msra.mxu0 0.0
    %913 = vmatprep.subr.mxu0 0.0
    %914 = vmatpush1.msra.mxu0 0.0
    %915 = vmatprep.subr.mxu0 0.0
    %916 = vmatpush1.msra.mxu0 0.0
    %917 = vmatprep.subr.mxu0 0.0
    %918 = vmatpush1.msra.mxu0 0.0
    %919 = vmatprep.subr.mxu0 0.0
    %920 = vmatpush1.msra.mxu0 0.0
    %921 = vmatprep.subr.mxu0 0.0
    %922 = vmatpush1.msra.mxu0 0.0
    %923 = vmatprep.subr.mxu0 0.0
    %924 = vmatpush1.msra.mxu0 0.0
    %925 = vmatprep.subr.mxu0 0.0
    %926 = vmatpush1.msra.mxu0 0.0
    %927 = vmatprep.subr.mxu0 0.0
    %928 = vmatpush1.msra.mxu0 0.0
    %929 = vmatprep.subr.mxu0 0.0
    %930 = vmatpush1.msra.mxu0 0.0
    %931 = vmatprep.subr.mxu0 0.0
    %932 = vmatpush1.msra.mxu0 0.0
    %933 = vmatprep.subr.mxu0 0.0
    %934 = vmatpush1.msra.mxu0 0.0
    %935 = vmatprep.subr.mxu0 0.0
    %936 = vmatpush1.msra.mxu0 0.0
    %937 = vmatprep.subr.mxu0 0.0
    %938 = vmatpush1.msra.mxu0 0.0
    %939 = vmatprep.subr.mxu0 0.0
    %940 = vmatpush1.msra.mxu0 0.0
    %941 = vmatprep.subr.mxu0 0.0
    %942 = vmatpush1.msra.mxu0 0.0
    %943 = vmatprep.subr.mxu0 0.0
    %944 = vmatpush1.msra.mxu0 0.0
    %945 = vmatprep.subr.mxu0 0.0
    %946 = vmatpush1.msra.mxu0 0.0
    %947 = vmatprep.subr.mxu0 0.0
    %948 = vmatpush1.msra.mxu0 0.0
    %949 = vmatprep.subr.mxu0 0.0
    %950 = vmatpush1.msra.mxu0 0.0
    %951 = vmatprep.mubr.f32.mxu0 0.0
    %952 = vmatmul.mubr.f32.gmra.mrb[0].mxu0 %v885
    %v953 = vpop.f32.mrb[0].mxu0
    %v954 = vadd.f32 0.0, %v953
    %v955 = vpop.f32.mrb[0].mxu0
    %956 = vdwg.mxu0
    %957 = vrot.lane.b32.xlu0 %v167, 64
    %v958 = vpop.permute.xlu0 %957
    %v961 = vsel %vm186, %v868, 0
    %963 = vmatprep.subr.mxu0 0.0
    %964 = vmatpush1.msra.mxu0 %v958
    %965 = vmatprep.subr.mxu0 0.0
    %966 = vmatpush1.msra.mxu0 0.0
    %967 = vmatprep.subr.mxu0 0.0
    %968 = vmatpush1.msra.mxu0 0.0
    %969 = vmatprep.subr.mxu0 0.0
    %970 = vmatpush1.msra.mxu0 0.0
    %971 = vmatprep.subr.mxu0 0.0
    %972 = vmatpush1.msra.mxu0 0.0
    %973 = vmatprep.subr.mxu0 0.0
    %974 = vmatpush1.msra.mxu0 0.0
    %975 = vmatprep.subr.mxu0 0.0
    %976 = vmatpush1.msra.mxu0 0.0
    %977 = vmatprep.subr.mxu0 0.0
    %978 = vmatpush1.msra.mxu0 0.0
    %979 = vmatprep.subr.mxu0 0.0
    %980 = vmatpush1.msra.mxu0 0.0
    %981 = vmatprep.subr.mxu0 0.0
    %982 = vmatpush1.msra.mxu0 0.0
    %983 = vmatprep.subr.mxu0 0.0
    %984 = vmatpush1.msra.mxu0 0.0
    %985 = vmatprep.subr.mxu0 0.0
    %986 = vmatpush1.msra.mxu0 0.0
    %987 = vmatprep.subr.mxu0 0.0
    %988 = vmatpush1.msra.mxu0 0.0
    %989 = vmatprep.subr.mxu0 0.0
    %990 = vmatpush1.msra.mxu0 0.0
    %991 = vmatprep.subr.mxu0 0.0
    %992 = vmatpush1.msra.mxu0 0.0
    %993 = vmatprep.subr.mxu0 0.0
    %994 = vmatpush1.msra.mxu0 0.0
    %995 = vmatprep.subr.mxu0 0.0
    %996 = vmatpush1.msra.mxu0 0.0
    %997 = vmatprep.subr.mxu0 0.0
    %998 = vmatpush1.msra.mxu0 0.0
    %999 = vmatprep.subr.mxu0 0.0
    %1000 = vmatpush1.msra.mxu0 0.0
    %1001 = vmatprep.subr.mxu0 0.0
    %1002 = vmatpush1.msra.mxu0 0.0
    %1003 = vmatprep.subr.mxu0 0.0
    %1004 = vmatpush1.msra.mxu0 0.0
    %1005 = vmatprep.subr.mxu0 0.0
    %1006 = vmatpush1.msra.mxu0 0.0
    %1007 = vmatprep.subr.mxu0 0.0
    %1008 = vmatpush1.msra.mxu0 0.0
    %1009 = vmatprep.subr.mxu0 0.0
    %1010 = vmatpush1.msra.mxu0 0.0
    %1011 = vmatprep.subr.mxu0 0.0
    %1012 = vmatpush1.msra.mxu0 0.0
    %1013 = vmatprep.subr.mxu0 0.0
    %1014 = vmatpush1.msra.mxu0 0.0
    %1015 = vmatprep.subr.mxu0 0.0
    %1016 = vmatpush1.msra.mxu0 0.0
    %1017 = vmatprep.subr.mxu0 0.0
    %1018 = vmatpush1.msra.mxu0 0.0
    %1019 = vmatprep.subr.mxu0 0.0
    %1020 = vmatpush1.msra.mxu0 0.0
    %1021 = vmatprep.subr.mxu0 0.0
    %1022 = vmatpush1.msra.mxu0 0.0
    %1023 = vmatprep.subr.mxu0 0.0
    %1024 = vmatpush1.msra.mxu0 0.0
    %1025 = vmatprep.subr.mxu0 0.0
    %1026 = vmatpush1.msra.mxu0 0.0
    %1027 = vmatprep.mubr.f32.mxu0 0.0
    %1028 = vmatmul.mubr.f32.gmra.mrb[0].mxu0 %v961
    %v1029 = vpop.f32.mrb[0].mxu0
    %v1030 = vadd.f32 0.0, %v1029
    %v1031 = vpop.f32.mrb[0].mxu0
    %1032 = vdwg.mxu0
    %1033 = vrot.lane.b32.xlu0 %v173, 64
    %v1034 = vpop.permute.xlu0 %1033
    %v1037 = vsel %vm186, %v870, 0
    %1039 = vmatprep.subr.mxu0 0.0
    %1040 = vmatpush1.msra.mxu0 %v1034
    %1041 = vmatprep.subr.mxu0 0.0
    %1042 = vmatpush1.msra.mxu0 0.0
    %1043 = vmatprep.subr.mxu0 0.0
    %1044 = vmatpush1.msra.mxu0 0.0
    %1045 = vmatprep.subr.mxu0 0.0
    %1046 = vmatpush1.msra.mxu0 0.0
    %1047 = vmatprep.subr.mxu0 0.0
    %1048 = vmatpush1.msra.mxu0 0.0
    %1049 = vmatprep.subr.mxu0 0.0
    %1050 = vmatpush1.msra.mxu0 0.0
    %1051 = vmatprep.subr.mxu0 0.0
    %1052 = vmatpush1.msra.mxu0 0.0
    %1053 = vmatprep.subr.mxu0 0.0
    %1054 = vmatpush1.msra.mxu0 0.0
    %1055 = vmatprep.subr.mxu0 0.0
    %1056 = vmatpush1.msra.mxu0 0.0
    %1057 = vmatprep.subr.mxu0 0.0
    %1058 = vmatpush1.msra.mxu0 0.0
    %1059 = vmatprep.subr.mxu0 0.0
    %1060 = vmatpush1.msra.mxu0 0.0
    %1061 = vmatprep.subr.mxu0 0.0
    %1062 = vmatpush1.msra.mxu0 0.0
    %1063 = vmatprep.subr.mxu0 0.0
    %1064 = vmatpush1.msra.mxu0 0.0
    %1065 = vmatprep.subr.mxu0 0.0
    %1066 = vmatpush1.msra.mxu0 0.0
    %1067 = vmatprep.subr.mxu0 0.0
    %1068 = vmatpush1.msra.mxu0 0.0
    %1069 = vmatprep.subr.mxu0 0.0
    %1070 = vmatpush1.msra.mxu0 0.0
    %1071 = vmatprep.subr.mxu0 0.0
    %1072 = vmatpush1.msra.mxu0 0.0
    %1073 = vmatprep.subr.mxu0 0.0
    %1074 = vmatpush1.msra.mxu0 0.0
    %1075 = vmatprep.subr.mxu0 0.0
    %1076 = vmatpush1.msra.mxu0 0.0
    %1077 = vmatprep.subr.mxu0 0.0
    %1078 = vmatpush1.msra.mxu0 0.0
    %1079 = vmatprep.subr.mxu0 0.0
    %1080 = vmatpush1.msra.mxu0 0.0
    %1081 = vmatprep.subr.mxu0 0.0
    %1082 = vmatpush1.msra.mxu0 0.0
    %1083 = vmatprep.subr.mxu0 0.0
    %1084 = vmatpush1.msra.mxu0 0.0
    %1085 = vmatprep.subr.mxu0 0.0
    %1086 = vmatpush1.msra.mxu0 0.0
    %1087 = vmatprep.subr.mxu0 0.0
    %1088 = vmatpush1.msra.mxu0 0.0
    %1089 = vmatprep.subr.mxu0 0.0
    %1090 = vmatpush1.msra.mxu0 0.0
    %1091 = vmatprep.subr.mxu0 0.0
    %1092 = vmatpush1.msra.mxu0 0.0
    %1093 = vmatprep.subr.mxu0 0.0
    %1094 = vmatpush1.msra.mxu0 0.0
    %1095 = vmatprep.subr.mxu0 0.0
    %1096 = vmatpush1.msra.mxu0 0.0
    %1097 = vmatprep.subr.mxu0 0.0
    %1098 = vmatpush1.msra.mxu0 0.0
    %1099 = vmatprep.subr.mxu0 0.0
    %1100 = vmatpush1.msra.mxu0 0.0
    %1101 = vmatprep.subr.mxu0 0.0
    %1102 = vmatpush1.msra.mxu0 0.0
    %1103 = vmatprep.mubr.f32.mxu0 0.0
    %1104 = vmatmul.mubr.f32.gmra.mrb[0].mxu0 %v1037
    %v1105 = vpop.f32.mrb[0].mxu0
    %v1106 = vadd.f32 0.0, %v1105
    %v1107 = vpop.f32.mrb[0].mxu0
    %1108 = vdwg.mxu0
    %1109 = vrot.lane.b32.xlu0 %v175, 64
    %v1110 = vpop.permute.xlu0 %1109
    %v1113 = vsel %vm186, %v872, 0
    %1115 = vmatprep.subr.mxu0 0.0
    %1116 = vmatpush1.msra.mxu0 %v1110
    %1117 = vmatprep.subr.mxu0 0.0
    %1118 = vmatpush1.msra.mxu0 0.0
    %1119 = vmatprep.subr.mxu0 0.0
    %1120 = vmatpush1.msra.mxu0 0.0
    %1121 = vmatprep.subr.mxu0 0.0
    %1122 = vmatpush1.msra.mxu0 0.0
    %1123 = vmatprep.subr.mxu0 0.0
    %1124 = vmatpush1.msra.mxu0 0.0
    %1125 = vmatprep.subr.mxu0 0.0
    %1126 = vmatpush1.msra.mxu0 0.0
    %1127 = vmatprep.subr.mxu0 0.0
    %1128 = vmatpush1.msra.mxu0 0.0
    %1129 = vmatprep.subr.mxu0 0.0
    %1130 = vmatpush1.msra.mxu0 0.0
    %1131 = vmatprep.subr.mxu0 0.0
    %1132 = vmatpush1.msra.mxu0 0.0
    %1133 = vmatprep.subr.mxu0 0.0
    %1134 = vmatpush1.msra.mxu0 0.0
    %1135 = vmatprep.subr.mxu0 0.0
    %1136 = vmatpush1.msra.mxu0 0.0
    %1137 = vmatprep.subr.mxu0 0.0
    %1138 = vmatpush1.msra.mxu0 0.0
    %1139 = vmatprep.subr.mxu0 0.0
    %1140 = vmatpush1.msra.mxu0 0.0
    %1141 = vmatprep.subr.mxu0 0.0
    %1142 = vmatpush1.msra.mxu0 0.0
    %1143 = vmatprep.subr.mxu0 0.0
    %1144 = vmatpush1.msra.mxu0 0.0
    %1145 = vmatprep.subr.mxu0 0.0
    %1146 = vmatpush1.msra.mxu0 0.0
    %1147 = vmatprep.subr.mxu0 0.0
    %1148 = vmatpush1.msra.mxu0 0.0
    %1149 = vmatprep.subr.mxu0 0.0
    %1150 = vmatpush1.msra.mxu0 0.0
    %1151 = vmatprep.subr.mxu0 0.0
    %1152 = vmatpush1.msra.mxu0 0.0
    %1153 = vmatprep.subr.mxu0 0.0
    %1154 = vmatpush1.msra.mxu0 0.0
    %1155 = vmatprep.subr.mxu0 0.0
    %1156 = vmatpush1.msra.mxu0 0.0
    %1157 = vmatprep.subr.mxu0 0.0
    %1158 = vmatpush1.msra.mxu0 0.0
    %1159 = vmatprep.subr.mxu0 0.0
    %1160 = vmatpush1.msra.mxu0 0.0
    %1161 = vmatprep.subr.mxu0 0.0
    %1162 = vmatpush1.msra.mxu0 0.0
    %1163 = vmatprep.subr.mxu0 0.0
    %1164 = vmatpush1.msra.mxu0 0.0
    %1165 = vmatprep.subr.mxu0 0.0
    %1166 = vmatpush1.msra.mxu0 0.0
    %1167 = vmatprep.subr.mxu0 0.0
    %1168 = vmatpush1.msra.mxu0 0.0
    %1169 = vmatprep.subr.mxu0 0.0
    %1170 = vmatpush1.msra.mxu0 0.0
    %1171 = vmatprep.subr.mxu0 0.0
    %1172 = vmatpush1.msra.mxu0 0.0
    %1173 = vmatprep.subr.mxu0 0.0
    %1174 = vmatpush1.msra.mxu0 0.0
    %1175 = vmatprep.subr.mxu0 0.0
    %1176 = vmatpush1.msra.mxu0 0.0
    %1177 = vmatprep.subr.mxu0 0.0
    %1178 = vmatpush1.msra.mxu0 0.0
    %1179 = vmatprep.mubr.f32.mxu0 0.0
    %1180 = vmatmul.mubr.f32.gmra.mrb[0].mxu0 %v1113
    %v1181 = vpop.f32.mrb[0].mxu0
    %v1182 = vadd.f32 0.0, %v1181
    %v1183 = vpop.f32.mrb[0].mxu0
    %1184 = vdwg.mxu0
    %1185 = vrot.lane.b32.xlu0 %v177, 64
    %v1186 = vpop.permute.xlu0 %1185
    %v1189 = vsel %vm186, %v874, 0
    %1191 = vmatprep.subr.mxu0 0.0
    %1192 = vmatpush1.msra.mxu0 %v1186
    %1193 = vmatprep.subr.mxu0 0.0
    %1194 = vmatpush1.msra.mxu0 0.0
    %1195 = vmatprep.subr.mxu0 0.0
    %1196 = vmatpush1.msra.mxu0 0.0
    %1197 = vmatprep.subr.mxu0 0.0
    %1198 = vmatpush1.msra.mxu0 0.0
    %1199 = vmatprep.subr.mxu0 0.0
    %1200 = vmatpush1.msra.mxu0 0.0
    %1201 = vmatprep.subr.mxu0 0.0
    %1202 = vmatpush1.msra.mxu0 0.0
    %1203 = vmatprep.subr.mxu0 0.0
    %1204 = vmatpush1.msra.mxu0 0.0
    %1205 = vmatprep.subr.mxu0 0.0
    %1206 = vmatpush1.msra.mxu0 0.0
    %1207 = vmatprep.subr.mxu0 0.0
    %1208 = vmatpush1.msra.mxu0 0.0
    %1209 = vmatprep.subr.mxu0 0.0
    %1210 = vmatpush1.msra.mxu0 0.0
    %1211 = vmatprep.subr.mxu0 0.0
    %1212 = vmatpush1.msra.mxu0 0.0
    %1213 = vmatprep.subr.mxu0 0.0
    %1214 = vmatpush1.msra.mxu0 0.0
    %1215 = vmatprep.subr.mxu0 0.0
    %1216 = vmatpush1.msra.mxu0 0.0
    %1217 = vmatprep.subr.mxu0 0.0
    %1218 = vmatpush1.msra.mxu0 0.0
    %1219 = vmatprep.subr.mxu0 0.0
    %1220 = vmatpush1.msra.mxu0 0.0
    %1221 = vmatprep.subr.mxu0 0.0
    %1222 = vmatpush1.msra.mxu0 0.0
    %1223 = vmatprep.subr.mxu0 0.0
    %1224 = vmatpush1.msra.mxu0 0.0
    %1225 = vmatprep.subr.mxu0 0.0
    %1226 = vmatpush1.msra.mxu0 0.0
    %1227 = vmatprep.subr.mxu0 0.0
    %1228 = vmatpush1.msra.mxu0 0.0
    %1229 = vmatprep.subr.mxu0 0.0
    %1230 = vmatpush1.msra.mxu0 0.0
    %1231 = vmatprep.subr.mxu0 0.0
    %1232 = vmatpush1.msra.mxu0 0.0
    %1233 = vmatprep.subr.mxu0 0.0
    %1234 = vmatpush1.msra.mxu0 0.0
    %1235 = vmatprep.subr.mxu0 0.0
    %1236 = vmatpush1.msra.mxu0 0.0
    %1237 = vmatprep.subr.mxu0 0.0
    %1238 = vmatpush1.msra.mxu0 0.0
    %1239 = vmatprep.subr.mxu0 0.0
    %1240 = vmatpush1.msra.mxu0 0.0
    %1241 = vmatprep.subr.mxu0 0.0
    %1242 = vmatpush1.msra.mxu0 0.0
    %1243 = vmatprep.subr.mxu0 0.0
    %1244 = vmatpush1.msra.mxu0 0.0
    %1245 = vmatprep.subr.mxu0 0.0
    %1246 = vmatpush1.msra.mxu0 0.0
    %1247 = vmatprep.subr.mxu0 0.0
    %1248 = vmatpush1.msra.mxu0 0.0
    %1249 = vmatprep.subr.mxu0 0.0
    %1250 = vmatpush1.msra.mxu0 0.0
    %1251 = vmatprep.subr.mxu0 0.0
    %1252 = vmatpush1.msra.mxu0 0.0
    %1253 = vmatprep.subr.mxu0 0.0
    %1254 = vmatpush1.msra.mxu0 0.0
    %1255 = vmatprep.mubr.f32.mxu0 0.0
    %1256 = vmatmul.mubr.f32.gmra.mrb[0].mxu0 %v1189
    %v1257 = vpop.f32.mrb[0].mxu0
    %v1258 = vadd.f32 0.0, %v1257
    %v1259 = vpop.f32.mrb[0].mxu0
    %1260 = vdwg.mxu0
    %1261 = vrot.lane.b32.xlu0 %v179, 64
    %v1262 = vpop.permute.xlu0 %1261
    %v1265 = vsel %vm186, %v876, 0
    %1267 = vmatprep.subr.mxu0 0.0
    %1268 = vmatpush1.msra.mxu0 %v1262
    %1269 = vmatprep.subr.mxu0 0.0
    %1270 = vmatpush1.msra.mxu0 0.0
    %1271 = vmatprep.subr.mxu0 0.0
    %1272 = vmatpush1.msra.mxu0 0.0
    %1273 = vmatprep.subr.mxu0 0.0
    %1274 = vmatpush1.msra.mxu0 0.0
    %1275 = vmatprep.subr.mxu0 0.0
    %1276 = vmatpush1.msra.mxu0 0.0
    %1277 = vmatprep.subr.mxu0 0.0
    %1278 = vmatpush1.msra.mxu0 0.0
    %1279 = vmatprep.subr.mxu0 0.0
    %1280 = vmatpush1.msra.mxu0 0.0
    %1281 = vmatprep.subr.mxu0 0.0
    %1282 = vmatpush1.msra.mxu0 0.0
    %1283 = vmatprep.subr.mxu0 0.0
    %1284 = vmatpush1.msra.mxu0 0.0
    %1285 = vmatprep.subr.mxu0 0.0
    %1286 = vmatpush1.msra.mxu0 0.0
    %1287 = vmatprep.subr.mxu0 0.0
    %1288 = vmatpush1.msra.mxu0 0.0
    %1289 = vmatprep.subr.mxu0 0.0
    %1290 = vmatpush1.msra.mxu0 0.0
    %1291 = vmatprep.subr.mxu0 0.0
    %1292 = vmatpush1.msra.mxu0 0.0
    %1293 = vmatprep.subr.mxu0 0.0
    %1294 = vmatpush1.msra.mxu0 0.0
    %1295 = vmatprep.subr.mxu0 0.0
    %1296 = vmatpush1.msra.mxu0 0.0
    %1297 = vmatprep.subr.mxu0 0.0
    %1298 = vmatpush1.msra.mxu0 0.0
    %1299 = vmatprep.subr.mxu0 0.0
    %1300 = vmatpush1.msra.mxu0 0.0
    %1301 = vmatprep.subr.mxu0 0.0
    %1302 = vmatpush1.msra.mxu0 0.0
    %1303 = vmatprep.subr.mxu0 0.0
    %1304 = vmatpush1.msra.mxu0 0.0
    %1305 = vmatprep.subr.mxu0 0.0
    %1306 = vmatpush1.msra.mxu0 0.0
    %1307 = vmatprep.subr.mxu0 0.0
    %1308 = vmatpush1.msra.mxu0 0.0
    %1309 = vmatprep.subr.mxu0 0.0
    %1310 = vmatpush1.msra.mxu0 0.0
    %1311 = vmatprep.subr.mxu0 0.0
    %1312 = vmatpush1.msra.mxu0 0.0
    %1313 = vmatprep.subr.mxu0 0.0
    %1314 = vmatpush1.msra.mxu0 0.0
    %1315 = vmatprep.subr.mxu0 0.0
    %1316 = vmatpush1.msra.mxu0 0.0
    %1317 = vmatprep.subr.mxu0 0.0
    %1318 = vmatpush1.msra.mxu0 0.0
    %1319 = vmatprep.subr.mxu0 0.0
    %1320 = vmatpush1.msra.mxu0 0.0
    %1321 = vmatprep.subr.mxu0 0.0
    %1322 = vmatpush1.msra.mxu0 0.0
    %1323 = vmatprep.subr.mxu0 0.0
    %1324 = vmatpush1.msra.mxu0 0.0
    %1325 = vmatprep.subr.mxu0 0.0
    %1326 = vmatpush1.msra.mxu0 0.0
    %1327 = vmatprep.subr.mxu0 0.0
    %1328 = vmatpush1.msra.mxu0 0.0
    %1329 = vmatprep.subr.mxu0 0.0
    %1330 = vmatpush1.msra.mxu0 0.0
    %1331 = vmatprep.mubr.f32.mxu0 0.0
    %1332 = vmatmul.mubr.f32.gmra.mrb[0].mxu0 %v1265
    %v1333 = vpop.f32.mrb[0].mxu0
    %v1334 = vadd.f32 0.0, %v1333
    %v1335 = vpop.f32.mrb[0].mxu0
    %1336 = vdwg.mxu0
    %1337 = vrot.lane.b32.xlu0 %v181, 64
    %v1338 = vpop.permute.xlu0 %1337
    %v1341 = vsel %vm186, %v878, 0
    %1343 = vmatprep.subr.mxu0 0.0
    %1344 = vmatpush1.msra.mxu0 %v1338
    %1345 = vmatprep.subr.mxu0 0.0
    %1346 = vmatpush1.msra.mxu0 0.0
    %1347 = vmatprep.subr.mxu0 0.0
    %1348 = vmatpush1.msra.mxu0 0.0
    %1349 = vmatprep.subr.mxu0 0.0
    %1350 = vmatpush1.msra.mxu0 0.0
    %1351 = vmatprep.subr.mxu0 0.0
    %1352 = vmatpush1.msra.mxu0 0.0
    %1353 = vmatprep.subr.mxu0 0.0
    %1354 = vmatpush1.msra.mxu0 0.0
    %1355 = vmatprep.subr.mxu0 0.0
    %1356 = vmatpush1.msra.mxu0 0.0
    %1357 = vmatprep.subr.mxu0 0.0
    %1358 = vmatpush1.msra.mxu0 0.0
    %1359 = vmatprep.subr.mxu0 0.0
    %1360 = vmatpush1.msra.mxu0 0.0
    %1361 = vmatprep.subr.mxu0 0.0
    %1362 = vmatpush1.msra.mxu0 0.0
    %1363 = vmatprep.subr.mxu0 0.0
    %1364 = vmatpush1.msra.mxu0 0.0
    %1365 = vmatprep.subr.mxu0 0.0
    %1366 = vmatpush1.msra.mxu0 0.0
    %1367 = vmatprep.subr.mxu0 0.0
    %1368 = vmatpush1.msra.mxu0 0.0
    %1369 = vmatprep.subr.mxu0 0.0
    %1370 = vmatpush1.msra.mxu0 0.0
    %1371 = vmatprep.subr.mxu0 0.0
    %1372 = vmatpush1.msra.mxu0 0.0
    %1373 = vmatprep.subr.mxu0 0.0
    %1374 = vmatpush1.msra.mxu0 0.0
    %1375 = vmatprep.subr.mxu0 0.0
    %1376 = vmatpush1.msra.mxu0 0.0
    %1377 = vmatprep.subr.mxu0 0.0
    %1378 = vmatpush1.msra.mxu0 0.0
    %1379 = vmatprep.subr.mxu0 0.0
    %1380 = vmatpush1.msra.mxu0 0.0
    %1381 = vmatprep.subr.mxu0 0.0
    %1382 = vmatpush1.msra.mxu0 0.0
    %1383 = vmatprep.subr.mxu0 0.0
    %1384 = vmatpush1.msra.mxu0 0.0
    %1385 = vmatprep.subr.mxu0 0.0
    %1386 = vmatpush1.msra.mxu0 0.0
    %1387 = vmatprep.subr.mxu0 0.0
    %1388 = vmatpush1.msra.mxu0 0.0
    %1389 = vmatprep.subr.mxu0 0.0
    %1390 = vmatpush1.msra.mxu0 0.0
    %1391 = vmatprep.subr.mxu0 0.0
    %1392 = vmatpush1.msra.mxu0 0.0
    %1393 = vmatprep.subr.mxu0 0.0
    %1394 = vmatpush1.msra.mxu0 0.0
    %1395 = vmatprep.subr.mxu0 0.0
    %1396 = vmatpush1.msra.mxu0 0.0
    %1397 = vmatprep.subr.mxu0 0.0
    %1398 = vmatpush1.msra.mxu0 0.0
    %1399 = vmatprep.subr.mxu0 0.0
    %1400 = vmatpush1.msra.mxu0 0.0
    %1401 = vmatprep.subr.mxu0 0.0
    %1402 = vmatpush1.msra.mxu0 0.0
    %1403 = vmatprep.subr.mxu0 0.0
    %1404 = vmatpush1.msra.mxu0 0.0
    %1405 = vmatprep.subr.mxu0 0.0
    %1406 = vmatpush1.msra.mxu0 0.0
    %1407 = vmatprep.mubr.f32.mxu0 0.0
    %1408 = vmatmul.mubr.f32.gmra.mrb[0].mxu0 %v1341
    %v1409 = vpop.f32.mrb[0].mxu0
    %v1410 = vadd.f32 0.0, %v1409
    %v1411 = vpop.f32.mrb[0].mxu0
    %1412 = vdwg.mxu0
    %1413 = vrot.lane.b32.xlu0 %v183, 64
    %v1414 = vpop.permute.xlu0 %1413
    %v1417 = vsel %vm186, %v880, 0
    %1419 = vmatprep.subr.mxu0 0.0
    %1420 = vmatpush1.msra.mxu0 %v1414
    %1421 = vmatprep.subr.mxu0 0.0
    %1422 = vmatpush1.msra.mxu0 0.0
    %1423 = vmatprep.subr.mxu0 0.0
    %1424 = vmatpush1.msra.mxu0 0.0
    %1425 = vmatprep.subr.mxu0 0.0
    %1426 = vmatpush1.msra.mxu0 0.0
    %1427 = vmatprep.subr.mxu0 0.0
    %1428 = vmatpush1.msra.mxu0 0.0
    %1429 = vmatprep.subr.mxu0 0.0
    %1430 = vmatpush1.msra.mxu0 0.0
    %1431 = vmatprep.subr.mxu0 0.0
    %1432 = vmatpush1.msra.mxu0 0.0
    %1433 = vmatprep.subr.mxu0 0.0
    %1434 = vmatpush1.msra.mxu0 0.0
    %1435 = vmatprep.subr.mxu0 0.0
    %1436 = vmatpush1.msra.mxu0 0.0
    %1437 = vmatprep.subr.mxu0 0.0
    %1438 = vmatpush1.msra.mxu0 0.0
    %1439 = vmatprep.subr.mxu0 0.0
    %1440 = vmatpush1.msra.mxu0 0.0
    %1441 = vmatprep.subr.mxu0 0.0
    %1442 = vmatpush1.msra.mxu0 0.0
    %1443 = vmatprep.subr.mxu0 0.0
    %1444 = vmatpush1.msra.mxu0 0.0
    %1445 = vmatprep.subr.mxu0 0.0
    %1446 = vmatpush1.msra.mxu0 0.0
    %1447 = vmatprep.subr.mxu0 0.0
    %1448 = vmatpush1.msra.mxu0 0.0
    %1449 = vmatprep.subr.mxu0 0.0
    %1450 = vmatpush1.msra.mxu0 0.0
    %1451 = vmatprep.subr.mxu0 0.0
    %1452 = vmatpush1.msra.mxu0 0.0
    %1453 = vmatprep.subr.mxu0 0.0
    %1454 = vmatpush1.msra.mxu0 0.0
    %1455 = vmatprep.subr.mxu0 0.0
    %1456 = vmatpush1.msra.mxu0 0.0
    %1457 = vmatprep.subr.mxu0 0.0
    %1458 = vmatpush1.msra.mxu0 0.0
    %1459 = vmatprep.subr.mxu0 0.0
    %1460 = vmatpush1.msra.mxu0 0.0
    %1461 = vmatprep.subr.mxu0 0.0
    %1462 = vmatpush1.msra.mxu0 0.0
    %1463 = vmatprep.subr.mxu0 0.0
    %1464 = vmatpush1.msra.mxu0 0.0
    %1465 = vmatprep.subr.mxu0 0.0
    %1466 = vmatpush1.msra.mxu0 0.0
    %1467 = vmatprep.subr.mxu0 0.0
    %1468 = vmatpush1.msra.mxu0 0.0
    %1469 = vmatprep.subr.mxu0 0.0
    %1470 = vmatpush1.msra.mxu0 0.0
    %1471 = vmatprep.subr.mxu0 0.0
    %1472 = vmatpush1.msra.mxu0 0.0
    %1473 = vmatprep.subr.mxu0 0.0
    %1474 = vmatpush1.msra.mxu0 0.0
    %1475 = vmatprep.subr.mxu0 0.0
    %1476 = vmatpush1.msra.mxu0 0.0
    %1477 = vmatprep.subr.mxu0 0.0
    %1478 = vmatpush1.msra.mxu0 0.0
    %1479 = vmatprep.subr.mxu0 0.0
    %1480 = vmatpush1.msra.mxu0 0.0
    %1481 = vmatprep.subr.mxu0 0.0
    %1482 = vmatpush1.msra.mxu0 0.0
    %1483 = vmatprep.mubr.f32.mxu0 0.0
    %1484 = vmatmul.mubr.f32.gmra.mrb[0].mxu0 %v1417
    %v1485 = vpop.f32.mrb[0].mxu0
    %v1486 = vadd.f32 0.0, %v1485
    %v1487 = vpop.f32.mrb[0].mxu0
    %1488 = vdwg.mxu0
    %1491 = vrot.lane.b32.xlu0 %v1106, 8
    %v1492 = vpop.permute.xlu0 %1491
    %1493 = vrot.lane.b32.xlu0 %v1182, 8
    %v1494 = vpop.permute.xlu0 %1493
    %1499 = vrot.lane.b32.xlu0 %v1258, 16
    %v1500 = vpop.permute.xlu0 %1499
    %1501 = vrot.lane.b32.xlu0 %v1334, 16
    %v1502 = vpop.permute.xlu0 %1501
    %1507 = vrot.lane.b32.xlu0 %v1410, 24
    %v1508 = vpop.permute.xlu0 %1507
    %1509 = vrot.lane.b32.xlu0 %v1486, 24
    %v1510 = vpop.permute.xlu0 %1509
    %v1513 = vsel %vm186, %v954, %v1492
    %v1514 = vsel %vm186, %v1030, %v1494
    %vm1515 = vcmask 130048
    %v1516 = vsel %vm1515, %v1513, %v1500
    %v1517 = vsel %vm1515, %v1514, %v1502
    %vm1518 = vcmask 195584
    %v1519 = vsel %vm1518, %v1516, %v1508
    %v1520 = vsel %vm1518, %v1517, %v1510
    %v1521 = vlaneseq
    %v1522 = vshrl.u32 %v1521, 7
    %v1523 = vsub.s32 0, %v1522
    %v1524 = vrot.slane %v77, %v1523
    %v1526 = vsel %vm88, %v1519, 0
    %v1529 = vsel %vm88, %v1520, 0
    %1531 = vmatprep.subr.mxu0 0.0
    %1532 = vmatpush1.msra.mxu0 %v60
    %1533 = vmatprep.subr.mxu0 0.0
    %1534 = vmatpush1.msra.mxu0 %v61
    %1535 = vmatprep.subr.mxu0 0.0
    %1536 = vmatpush1.msra.mxu0 %v62
    %1537 = vmatprep.subr.mxu0 0.0
    %1538 = vmatpush1.msra.mxu0 %v63
    %1539 = vmatprep.subr.mxu0 0.0
    %1540 = vmatpush1.msra.mxu0 0.0
    %1541 = vmatprep.subr.mxu0 0.0
    %1542 = vmatpush1.msra.mxu0 0.0
    %1543 = vmatprep.subr.mxu0 0.0
    %1544 = vmatpush1.msra.mxu0 0.0
    %1545 = vmatprep.subr.mxu0 0.0
    %1546 = vmatpush1.msra.mxu0 0.0
    %1547 = vmatprep.subr.mxu0 0.0
    %1548 = vmatpush1.msra.mxu0 0.0
    %1549 = vmatprep.subr.mxu0 0.0
    %1550 = vmatpush1.msra.mxu0 0.0
    %1551 = vmatprep.subr.mxu0 0.0
    %1552 = vmatpush1.msra.mxu0 0.0
    %1553 = vmatprep.subr.mxu0 0.0
    %1554 = vmatpush1.msra.mxu0 0.0
    %1555 = vmatprep.subr.mxu0 0.0
    %1556 = vmatpush1.msra.mxu0 0.0
    %1557 = vmatprep.subr.mxu0 0.0
    %1558 = vmatpush1.msra.mxu0 0.0
    %1559 = vmatprep.subr.mxu0 0.0
    %1560 = vmatpush1.msra.mxu0 0.0
    %1561 = vmatprep.subr.mxu0 0.0
    %1562 = vmatpush1.msra.mxu0 0.0
    %1563 = vmatprep.subr.mxu0 0.0
    %1564 = vmatpush1.msra.mxu0 0.0
    %1565 = vmatprep.subr.mxu0 0.0
    %1566 = vmatpush1.msra.mxu0 0.0
    %1567 = vmatprep.subr.mxu0 0.0
    %1568 = vmatpush1.msra.mxu0 0.0
    %1569 = vmatprep.subr.mxu0 0.0
    %1570 = vmatpush1.msra.mxu0 0.0
    %1571 = vmatprep.subr.mxu0 0.0
    %1572 = vmatpush1.msra.mxu0 0.0
    %1573 = vmatprep.subr.mxu0 0.0
    %1574 = vmatpush1.msra.mxu0 0.0
    %1575 = vmatprep.subr.mxu0 0.0
    %1576 = vmatpush1.msra.mxu0 0.0
    %1577 = vmatprep.subr.mxu0 0.0
    %1578 = vmatpush1.msra.mxu0 0.0
    %1579 = vmatprep.subr.mxu0 0.0
    %1580 = vmatpush1.msra.mxu0 0.0
    %1581 = vmatprep.subr.mxu0 0.0
    %1582 = vmatpush1.msra.mxu0 0.0
    %1583 = vmatprep.subr.mxu0 0.0
    %1584 = vmatpush1.msra.mxu0 0.0
    %1585 = vmatprep.subr.mxu0 0.0
    %1586 = vmatpush1.msra.mxu0 0.0
    %1587 = vmatprep.subr.mxu0 0.0
    %1588 = vmatpush1.msra.mxu0 0.0
    %1589 = vmatprep.subr.mxu0 0.0
    %1590 = vmatpush1.msra.mxu0 0.0
    %1591 = vmatprep.subr.mxu0 0.0
    %1592 = vmatpush1.msra.mxu0 0.0
    %1593 = vmatprep.subr.mxu0 0.0
    %1594 = vmatpush1.msra.mxu0 0.0
    %1595 = vmatprep.mubr.f32.mxu0 0.0
    %1596 = vmatmul.mubr.f32.gmra.mrb[0].mxu0 %v1526
    %v1597 = vpop.f32.mrb[0].mxu0
    %v1598 = vadd.f32 %v1524, %v1597
    %v1599 = vpop.f32.mrb[0].mxu0
    %1600 = vmatprep.mubr.f32.mxu0 0.0
    %1601 = vmatmul.mubr.f32.gmra.mrb[0].mxu0 %v1529
    %v1602 = vpop.f32.mrb[0].mxu0
    %v1603 = vadd.f32 %v1524, %v1602
    %v1604 = vpop.f32.mrb[0].mxu0
    %1605 = vdwg.mxu0
    %v1606 = vadd.f32 %v54, %v1598
    %v1607 = vadd.f32 %v55, %v1603
    %v1608 = vsel %vm88, %v1606, 0.0
    %1609 = vadd.xlane.f32.xlu0 %v1608
    %v1610 = vpop.xlane.xlu0 %1609
    %v1611 = vsel %vm88, %v1607, 0.0
    %1612 = vadd.xlane.f32.xlu0 %v1611
    %v1613 = vpop.xlane.xlu0 %1612
    %v1614 = vrcp.pop 32.0
    %v1615 = vmul.f32 %v1610, %v1614
    %v1616 = vmul.f32 %v1613, %v1614
    %v1617 = vsub.f32 %v1606, %v1615
    %v1618 = vsub.f32 %v1607, %v1616
    %v1619 = vmul.f32 %v1617, %v1617
    %v1620 = vmul.f32 %v1618, %v1618
    %v1621 = vsel %vm88, %v1619, 0.0
    %1622 = vadd.xlane.f32.xlu0 %v1621
    %v1623 = vpop.xlane.xlu0 %1622
    %v1624 = vsel %vm88, %v1620, 0.0
    %1625 = vadd.xlane.f32.xlu0 %v1624
    %v1626 = vpop.xlane.xlu0 %1625
    %v1627 = vmul.f32 %v1623, %v1614
    %v1628 = vmul.f32 %v1626, %v1614
    %v1629 = vadd.f32 %v1627, 1e-05
    %v1630 = vadd.f32 %v1628, 1e-05
    %v1631 = vrsqrt.pop %v1629
    %v1632 = vrsqrt.pop %v1630
    %v1633 = vmul.f32 %v1617, %v1631
    %v1634 = vmul.f32 %v1618, %v1632
    %v1635 = vlaneseq
    %v1636 = vshrl.u32 %v1635, 7
    %v1637 = vsub.s32 0, %v1636
    %v1638 = vrot.slane %v78, %v1637
    %v1639 = vmul.f32 %v1633, %v1638
    %v1640 = vmul.f32 %v1634, %v1638
    %v1641 = vlaneseq
    %v1642 = vshrl.u32 %v1641, 7
    %v1643 = vsub.s32 0, %v1642
    %v1644 = vrot.slane %v79, %v1643
    %v1645 = vadd.f32 %v1639, %v1644
    %v1646 = vadd.f32 %v1640, %v1644
    %v1647 = vlaneseq
    %v1648 = vshrl.u32 %v1647, 7
    %v1649 = vsub.s32 0, %v1648
    %v1650 = vrot.slane %v80, %v1649
    %v1652 = vsel %vm88, %v1645, 0
    %v1655 = vsel %vm88, %v1646, 0
    %1657 = vmatprep.subr.mxu0 0.0
    %1658 = vmatpush1.msra.mxu0 %v64
    %1659 = vmatprep.subr.mxu0 0.0
    %1660 = vmatpush1.msra.mxu0 %v65
    %1661 = vmatprep.subr.mxu0 0.0
    %1662 = vmatpush1.msra.mxu0 %v66
    %1663 = vmatprep.subr.mxu0 0.0
    %1664 = vmatpush1.msra.mxu0 %v67
    %1665 = vmatprep.subr.mxu0 0.0
    %1666 = vmatpush1.msra.mxu0 0.0
    %1667 = vmatprep.subr.mxu0 0.0
    %1668 = vmatpush1.msra.mxu0 0.0
    %1669 = vmatprep.subr.mxu0 0.0
    %1670 = vmatpush1.msra.mxu0 0.0
    %1671 = vmatprep.subr.mxu0 0.0
    %1672 = vmatpush1.msra.mxu0 0.0
    %1673 = vmatprep.subr.mxu0 0.0
    %1674 = vmatpush1.msra.mxu0 0.0
    %1675 = vmatprep.subr.mxu0 0.0
    %1676 = vmatpush1.msra.mxu0 0.0
    %1677 = vmatprep.subr.mxu0 0.0
    %1678 = vmatpush1.msra.mxu0 0.0
    %1679 = vmatprep.subr.mxu0 0.0
    %1680 = vmatpush1.msra.mxu0 0.0
    %1681 = vmatprep.subr.mxu0 0.0
    %1682 = vmatpush1.msra.mxu0 0.0
    %1683 = vmatprep.subr.mxu0 0.0
    %1684 = vmatpush1.msra.mxu0 0.0
    %1685 = vmatprep.subr.mxu0 0.0
    %1686 = vmatpush1.msra.mxu0 0.0
    %1687 = vmatprep.subr.mxu0 0.0
    %1688 = vmatpush1.msra.mxu0 0.0
    %1689 = vmatprep.subr.mxu0 0.0
    %1690 = vmatpush1.msra.mxu0 0.0
    %1691 = vmatprep.subr.mxu0 0.0
    %1692 = vmatpush1.msra.mxu0 0.0
    %1693 = vmatprep.subr.mxu0 0.0
    %1694 = vmatpush1.msra.mxu0 0.0
    %1695 = vmatprep.subr.mxu0 0.0
    %1696 = vmatpush1.msra.mxu0 0.0
    %1697 = vmatprep.subr.mxu0 0.0
    %1698 = vmatpush1.msra.mxu0 0.0
    %1699 = vmatprep.subr.mxu0 0.0
    %1700 = vmatpush1.msra.mxu0 0.0
    %1701 = vmatprep.subr.mxu0 0.0
    %1702 = vmatpush1.msra.mxu0 0.0
    %1703 = vmatprep.subr.mxu0 0.0
    %1704 = vmatpush1.msra.mxu0 0.0
    %1705 = vmatprep.subr.mxu0 0.0
    %1706 = vmatpush1.msra.mxu0 0.0
    %1707 = vmatprep.subr.mxu0 0.0
    %1708 = vmatpush1.msra.mxu0 0.0
    %1709 = vmatprep.subr.mxu0 0.0
    %1710 = vmatpush1.msra.mxu0 0.0
    %1711 = vmatprep.subr.mxu0 0.0
    %1712 = vmatpush1.msra.mxu0 0.0
    %1713 = vmatprep.subr.mxu0 0.0
    %1714 = vmatpush1.msra.mxu0 0.0
    %1715 = vmatprep.subr.mxu0 0.0
    %1716 = vmatpush1.msra.mxu0 0.0
    %1717 = vmatprep.subr.mxu0 0.0
    %1718 = vmatpush1.msra.mxu0 0.0
    %1719 = vmatprep.subr.mxu0 0.0
    %1720 = vmatpush1.msra.mxu0 0.0
    %1721 = vmatprep.mubr.f32.mxu0 0.0
    %1722 = vmatmul.mubr.f32.gmra.mrb[0].mxu0 %v1652
    %v1723 = vpop.f32.mrb[0].mxu0
    %v1724 = vadd.f32 %v1650, %v1723
    %v1725 = vpop.f32.mrb[0].mxu0
    %1726 = vmatprep.mubr.f32.mxu0 0.0
    %1727 = vmatmul.mubr.f32.gmra.mrb[0].mxu0 %v1655
    %v1728 = vpop.f32.mrb[0].mxu0
    %v1729 = vadd.f32 %v1650, %v1728
    %v1730 = vpop.f32.mrb[0].mxu0
    %1731 = vdwg.mxu0
    %v1732 = vmax.f32 %v1724, 0.0
    %v1733 = vmax.f32 %v1729, 0.0
    %v1734 = vlaneseq
    %v1735 = vshrl.u32 %v1734, 7
    %v1736 = vsub.s32 0, %v1735
    %v1737 = vrot.slane %v81, %v1736
    %vm1738 = vcmask 523264
    %v1740 = vsel %vm1738, %v1732, 0
    %v1743 = vsel %vm1738, %v1733, 0
    %1745 = vmatprep.subr.mxu0 0.0
    %1746 = vmatpush1.msra.mxu0 %v68
    %1747 = vmatprep.subr.mxu0 0.0
    %1748 = vmatpush1.msra.mxu0 %v69
    %1749 = vmatprep.subr.mxu0 0.0
    %1750 = vmatpush1.msra.mxu0 %v70
    %1751 = vmatprep.subr.mxu0 0.0
    %1752 = vmatpush1.msra.mxu0 %v71
    %1753 = vmatprep.subr.mxu0 0.0
    %1754 = vmatpush1.msra.mxu0 %v72
    %1755 = vmatprep.subr.mxu0 0.0
    %1756 = vmatpush1.msra.mxu0 %v73
    %1757 = vmatprep.subr.mxu0 0.0
    %1758 = vmatpush1.msra.mxu0 %v74
    %1759 = vmatprep.subr.mxu0 0.0
    %1760 = vmatpush1.msra.mxu0 %v75
    %1761 = vmatprep.subr.mxu0 0.0
    %1762 = vmatpush1.msra.mxu0 0.0
    %1763 = vmatprep.subr.mxu0 0.0
    %1764 = vmatpush1.msra.mxu0 0.0
    %1765 = vmatprep.subr.mxu0 0.0
    %1766 = vmatpush1.msra.mxu0 0.0
    %1767 = vmatprep.subr.mxu0 0.0
    %1768 = vmatpush1.msra.mxu0 0.0
    %1769 = vmatprep.subr.mxu0 0.0
    %1770 = vmatpush1.msra.mxu0 0.0
    %1771 = vmatprep.subr.mxu0 0.0
    %1772 = vmatpush1.msra.mxu0 0.0
    %1773 = vmatprep.subr.mxu0 0.0
    %1774 = vmatpush1.msra.mxu0 0.0
    %1775 = vmatprep.subr.mxu0 0.0
    %1776 = vmatpush1.msra.mxu0 0.0
    %1777 = vmatprep.subr.mxu0 0.0
    %1778 = vmatpush1.msra.mxu0 0.0
    %1779 = vmatprep.subr.mxu0 0.0
    %1780 = vmatpush1.msra.mxu0 0.0
    %1781 = vmatprep.subr.mxu0 0.0
    %1782 = vmatpush1.msra.mxu0 0.0
    %1783 = vmatprep.subr.mxu0 0.0
    %1784 = vmatpush1.msra.mxu0 0.0
    %1785 = vmatprep.subr.mxu0 0.0
    %1786 = vmatpush1.msra.mxu0 0.0
    %1787 = vmatprep.subr.mxu0 0.0
    %1788 = vmatpush1.msra.mxu0 0.0
    %1789 = vmatprep.subr.mxu0 0.0
    %1790 = vmatpush1.msra.mxu0 0.0
    %1791 = vmatprep.subr.mxu0 0.0
    %1792 = vmatpush1.msra.mxu0 0.0
    %1793 = vmatprep.subr.mxu0 0.0
    %1794 = vmatpush1.msra.mxu0 0.0
    %1795 = vmatprep.subr.mxu0 0.0
    %1796 = vmatpush1.msra.mxu0 0.0
    %1797 = vmatprep.subr.mxu0 0.0
    %1798 = vmatpush1.msra.mxu0 0.0
    %1799 = vmatprep.subr.mxu0 0.0
    %1800 = vmatpush1.msra.mxu0 0.0
    %1801 = vmatprep.subr.mxu0 0.0
    %1802 = vmatpush1.msra.mxu0 0.0
    %1803 = vmatprep.subr.mxu0 0.0
    %1804 = vmatpush1.msra.mxu0 0.0
    %1805 = vmatprep.subr.mxu0 0.0
    %1806 = vmatpush1.msra.mxu0 0.0
    %1807 = vmatprep.subr.mxu0 0.0
    %1808 = vmatpush1.msra.mxu0 0.0
    %1809 = vmatprep.mubr.f32.mxu0 0.0
    %1810 = vmatmul.mubr.f32.gmra.mrb[0].mxu0 %v1740
    %v1811 = vpop.f32.mrb[0].mxu0
    %v1812 = vadd.f32 %v1737, %v1811
    %v1813 = vpop.f32.mrb[0].mxu0
    %1814 = vmatprep.mubr.f32.mxu0 0.0
    %1815 = vmatmul.mubr.f32.gmra.mrb[0].mxu0 %v1743
    %v1816 = vpop.f32.mrb[0].mxu0
    %v1817 = vadd.f32 %v1737, %v1816
    %v1818 = vpop.f32.mrb[0].mxu0
    %1819 = vdwg.mxu0
    %v1820 = vadd.f32 %v1645, %v1812
    %v1821 = vadd.f32 %v1646, %v1817
    %v1822 = vsel %vm88, %v1820, 0.0
    %1823 = vadd.xlane.f32.xlu0 %v1822
    %v1824 = vpop.xlane.xlu0 %1823
    %v1825 = vsel %vm88, %v1821, 0.0
    %1826 = vadd.xlane.f32.xlu0 %v1825
    %v1827 = vpop.xlane.xlu0 %1826
    %v1828 = vmul.f32 %v1824, %v1614
    %v1829 = vmul.f32 %v1827, %v1614
    %v1830 = vsub.f32 %v1820, %v1828
    %v1831 = vsub.f32 %v1821, %v1829
    %v1832 = vmul.f32 %v1830, %v1830
    %v1833 = vmul.f32 %v1831, %v1831
    %v1834 = vsel %vm88, %v1832, 0.0
    %1835 = vadd.xlane.f32.xlu0 %v1834
    %v1836 = vpop.xlane.xlu0 %1835
    %v1837 = vsel %vm88, %v1833, 0.0
    %1838 = vadd.xlane.f32.xlu0 %v1837
    %v1839 = vpop.xlane.xlu0 %1838
    %v1840 = vmul.f32 %v1836, %v1614
    %v1841 = vmul.f32 %v1839, %v1614
    %v1842 = vadd.f32 %v1840, 1e-05
    %v1843 = vadd.f32 %v1841, 1e-05
    %v1844 = vrsqrt.pop %v1842
    %v1845 = vrsqrt.pop %v1843
    %v1846 = vmul.f32 %v1830, %v1844
    %v1847 = vmul.f32 %v1831, %v1845
    %v1848 = vlaneseq
    %v1849 = vshrl.u32 %v1848, 7
    %v1850 = vsub.s32 0, %v1849
    %v1851 = vrot.slane %v82, %v1850
    %v1852 = vmul.f32 %v1846, %v1851
    %v1853 = vmul.f32 %v1847, %v1851
    %v1854 = vlaneseq
    %v1855 = vshrl.u32 %v1854, 7
    %v1856 = vsub.s32 0, %v1855
    %v1857 = vrot.slane %v83, %v1856
    %v1858 = vadd.f32 %v1852, %v1857
    %v1859 = vadd.f32 %v1853, %v1857
    %1860 = vst.msk [vmem:[#allocation8] sm:$0xff] %vm88, %v1858
    %1861 = vst.msk [vmem:[#allocation8 + $0x8] sm:$0xff] %vm88, %v1859
    // Predicated region
    $region26: #{transformer_block.1} parent=1 // pred_check
      _
    $region27: #{transformer_block.1} parent=1 // pred_check_branch
      %1863 = sbr.rel (0) target = $region29
    $region28: #{transformer_block.1} parent=1 // pred_region
      %s1865 = ssub.s32 256, 256
      %1866 = vsyncadd [#allocation4], %s1865
      %s1867 = sshll.u32 [#allocation8], 4
      %s1868 = int_to_ptr.vmem [resolvable:$true] %s1867
      %1873 = dma.vmem_to_hbm [thread:$0]  %s1868, 256, %s3, [#allocation4], 128, 128, 8
    $region29: #{transformer_block.1} parent=1 // pred_fallthru
      _
    // Predicated region
    $region30: #{transformer_block.1} parent=1 // pred_check
      _
    $region31: #{transformer_block.1} parent=1 // pred_check_branch
      %1875 = sbr.rel (0) target = $region33
    $region32: #{transformer_block.1} parent=1 // pred_region
      %1876 = dma.done [#allocation4], 256
    $region33: #{transformer_block.1} parent=1 // pred_fallthru
      _
    %1877 = vsyncpa [#allocation3], 1
    %1878 = vsyncpa [#allocation6], 1
    %1879 = vsyncpa [#allocation4], 1

</llo_original>
